<compile_context>
chip_gen: v7x
topology: tpu7x:2x2x1
jax: 0.10.0
libtpu: 0.0.40
codegen_flags: <defaults>
</compile_context>

<pallas_src>
import functools

import jax
import jax.numpy as jnp
import numpy as np
from jax.experimental import pallas as pl
from jax.experimental.pallas import tpu as pltpu


# ----------------------------------------------------------------------------
# Fused kernel: all LSTM layers + output Linear, single invocation (no grid).
# ----------------------------------------------------------------------------
def _fused_lstm_kernel(T, B, H, num_layers, *refs):
    # refs = [x_ref,
    #         w_ih_0, w_hh_0, b_0, ..., w_ih_{L-1}, w_hh_{L-1}, b_{L-1},
    #         w_out, b_out,
    #         out_ref]
    x_ref = refs[0]
    layer_refs = refs[1:1 + 3 * num_layers]
    w_out_ref = refs[1 + 3 * num_layers]
    b_out_ref = refs[2 + 3 * num_layers]
    out_ref = refs[3 + 3 * num_layers]

    # Hoist every weight load out of the unrolled loops (VMEM -> vregs once).
    w_ih = [layer_refs[3 * l + 0][...] for l in range(num_layers)]   # bf16
    w_hh = [layer_refs[3 * l + 1][...] for l in range(num_layers)]   # bf16
    bias = [layer_refs[3 * l + 2][...] for l in range(num_layers)]   # f32 (1, 4H)

    # Bulk input projection for layer 0 over ALL timesteps: one MXU matmul,
    # f32 accumulation, result stays a value (no scratch round-trip).
    gx0 = jnp.dot(x_ref[...], w_ih[0],
                  preferred_element_type=jnp.float32) + bias[0]       # (T*B, 4H)

    def cell(gates, c_prev):
        # Full-width activations on the (B, 4H) value (EUP), then static lane
        # slices; all elementwise math in f32.  PyTorch gate order: i, f, g, o.
        sg = jax.nn.sigmoid(gates)
        tg = jnp.tanh(gates)
        i = sg[:, 0 * H:1 * H]
        f = sg[:, 1 * H:2 * H]
        g = tg[:, 2 * H:3 * H]
        o = sg[:, 3 * H:4 * H]
        c_new = f * c_prev + i * g
        h_new = o * jnp.tanh(c_new)
        return h_new, c_new

    h = [jnp.zeros((B, H), jnp.float32) for _ in range(num_layers)]
    c = [jnp.zeros((B, H), jnp.float32) for _ in range(num_layers)]
    top_h = []

    # Fully unrolled wavefront over time: within a step, layer l consumes the
    # freshly produced h of layer l-1 (identical math to layer-by-layer), but
    # the dependency DAG lets cell (t, l) overlap with (t+1, l-1), etc.
    for t in range(T):
        gates0 = gx0[t * B:(t + 1) * B, :] + jnp.dot(
            h[0].astype(jnp.bfloat16), w_hh[0],
            preferred_element_type=jnp.float32)
        h[0], c[0] = cell(gates0, c[0])
        for l in range(1, num_layers):
            gates = (jnp.dot(h[l - 1].astype(jnp.bfloat16), w_ih[l],
                             preferred_element_type=jnp.float32)
                     + jnp.dot(h[l].astype(jnp.bfloat16), w_hh[l],
                               preferred_element_type=jnp.float32)
                     + bias[l])
            h[l], c[l] = cell(gates, c[l])
        top_h.append(h[num_layers - 1])

    # One bulk, lane-dense output Linear + single unmasked store.
    acts = jnp.concatenate(top_h, axis=0).astype(jnp.bfloat16)        # (T*B, H)
    out_ref[...] = (jnp.dot(acts, w_out_ref[...],
                            preferred_element_type=jnp.float32)
                    + b_out_ref[...])


def _build_fused_call(T, B, D_in, H, O_pad, num_layers):
    kernel = functools.partial(_fused_lstm_kernel, T, B, H, num_layers)
    n_inputs = 1 + 3 * num_layers + 2
    vmem = pltpu.MemorySpace.VMEM

    flops = (
        2 * T * B * D_in * 4 * H                          # layer-0 bulk x @ W_ih
        + T * num_layers * 2 * B * H * 4 * H              # h @ W_hh per step/layer
        + T * (num_layers - 1) * 2 * B * H * 4 * H        # h_below @ W_ih (upper layers)
        + 2 * T * B * H * O_pad                           # output Linear
    )
    transcendentals = T * num_layers * B * (2 * 4 * H + H)
    bytes_accessed = (
        T * B * D_in * 2                                  # x (bf16)
        + (D_in * 4 * H + H * 4 * H) * 2 + 4 * H * 4      # layer 0 weights
        + (num_layers - 1) * (2 * H * 4 * H * 2 + 4 * H * 4)
        + H * O_pad * 2 + O_pad * 4                       # output weights
        + T * B * O_pad * 4                               # output
    )

    return pl.pallas_call(
        kernel,
        out_shape=jax.ShapeDtypeStruct((T * B, O_pad), jnp.float32),
        in_specs=[pl.BlockSpec(memory_space=vmem)] * n_inputs,
        out_specs=pl.BlockSpec(memory_space=vmem),
        cost_estimate=pl.CostEstimate(
            flops=flops,
            transcendentals=transcendentals,
            bytes_accessed=bytes_accessed,
        ),
    )


# ----------------------------------------------------------------------------
# Full forward of lstmwrapper2 (inference).
# ----------------------------------------------------------------------------
def lstmwrapper2_forward(x_btd, params):
    """x_btd: (B, T, input_size) batch-first, like PyTorch with batch_first=True."""
    B, T, D_in = x_btd.shape
    H = params["lstm_layers"][0][1].shape[0]
    O = params["w_out_t"].shape[1]
    num_layers = len(params["lstm_layers"])
    O_pad = ((O + 127) // 128) * 128          # lane-dense kernel output

    # time-major, flattened: row (t*B + b); bf16 MXU operand.
    x_tm = (jnp.transpose(x_btd.astype(jnp.float32), (1, 0, 2))
            .reshape(T * B, D_in).astype(jnp.bfloat16))

    flat_weights = []
    for (w_ih_t, w_hh_t, b) in params["lstm_layers"]:
        flat_weights += [w_ih_t.astype(jnp.bfloat16),
                         w_hh_t.astype(jnp.bfloat16),
                         b.astype(jnp.float32)]
    w_out_p = jnp.pad(params["w_out_t"].astype(jnp.bfloat16),
                      ((0, 0), (0, O_pad - O)))
    b_out_p = jnp.pad(params["b_out"].astype(jnp.float32),
                      ((0, 0), (0, O_pad - O)))
    flat_weights += [w_out_p, b_out_p]

    y = _build_fused_call(T, B, D_in, H, O_pad, num_layers)(x_tm, *flat_weights)
    y = y[:, :O]                                           # drop lane padding
    return jnp.transpose(y.reshape(T, B, O), (1, 0, 2))    # (B, T, output_size)


# ----------------------------------------------------------------------------
# Pure-JAX f32 reference (matches PyTorch nn.LSTM + nn.Linear eval semantics).
# ----------------------------------------------------------------------------
def reference_forward(x_btd, params):
    x = jnp.transpose(x_btd, (1, 0, 2)).astype(jnp.float32)
    for (w_ih_t, w_hh_t, b) in params["lstm_layers"]:
        T, B, _ = x.shape
        H = w_hh_t.shape[0]
        h = jnp.zeros((B, H), jnp.float32)
        c = jnp.zeros((B, H), jnp.float32)
        outs = []
        for t in range(T):
            gates = x[t] @ w_ih_t + h @ w_hh_t + b
            i = jax.nn.sigmoid(gates[:, 0 * H:1 * H])
            f = jax.nn.sigmoid(gates[:, 1 * H:2 * H])
            g = jnp.tanh(gates[:, 2 * H:3 * H])
            o = jax.nn.sigmoid(gates[:, 3 * H:4 * H])
            c = f * c + i * g
            h = o * jnp.tanh(c)
            outs.append(h)
        x = jnp.stack(outs, axis=0)
    y = x @ params["w_out_t"] + params["b_out"]
    return jnp.transpose(y, (1, 0, 2))


# ----------------------------------------------------------------------------
# Deterministic parameter init (PyTorch reset_parameters: U(-1/sqrt(H), 1/sqrt(H))).
# ----------------------------------------------------------------------------
def init_params(key, input_size, hidden_size, output_size, num_layers):
    k = 1.0 / np.sqrt(hidden_size)
    layers = []
    for layer in range(num_layers):
        d_in = input_size if layer == 0 else hidden_size
        key, k1, k2, k3, k4 = jax.random.split(key, 5)
        w_ih = jax.random.uniform(k1, (4 * hidden_size, d_in), jnp.float32, -k, k)
        w_hh = jax.random.uniform(k2, (4 * hidden_size, hidden_size), jnp.float32, -k, k)
        b_ih = jax.random.uniform(k3, (4 * hidden_size,), jnp.float32, -k, k)
        b_hh = jax.random.uniform(k4, (4 * hidden_size,), jnp.float32, -k, k)
        layers.append((w_ih.T, w_hh.T, (b_ih + b_hh).reshape(1, -1)))
    key, k5, k6 = jax.random.split(key, 3)
    w_out = jax.random.uniform(k5, (output_size, hidden_size), jnp.float32, -k, k)
    b_out = jax.random.uniform(k6, (output_size,), jnp.float32, -k, k)
    return {
        "lstm_layers": layers,
        "w_out_t": w_out.T,
        "b_out": b_out.reshape(1, -1),
    }


if __name__ == "__main__":
    # Small shapes consistent with the module's forward:
    B, T = 2, 8
    INPUT_SIZE, HIDDEN_SIZE, OUTPUT_SIZE, NUM_LAYERS = 16, 32, 8, 2

    key = jax.random.PRNGKey(0)
    key, kp, kx = jax.random.split(key, 3)
    params = init_params(kp, INPUT_SIZE, HIDDEN_SIZE, OUTPUT_SIZE, NUM_LAYERS)
    x = jax.random.normal(kx, (B, T, INPUT_SIZE), jnp.float32)

    fwd = jax.jit(lstmwrapper2_forward)
    out = jax.block_until_ready(fwd(x, params))
    ref = jax.block_until_ready(reference_forward(x, params))

    assert out.shape == (B, T, OUTPUT_SIZE), out.shape
    # bf16 MXU operands vs. f32 reference -> relaxed parity tolerance.
    np.testing.assert_allclose(np.asarray(out), np.asarray(ref),
                               rtol=2e-2, atol=2e-2)
    print("KERNEL_OK")
</pallas_src>

<mosaic_0001>
module attributes {stable_mosaic.version = 11 : i64} {
  func.func @_fused_lstm_kernel(%arg0: memref<16x16xbf16, #tpu.memory_space<vmem>>, %arg1: memref<16x128xbf16, #tpu.memory_space<vmem>>, %arg2: memref<32x128xbf16, #tpu.memory_space<vmem>>, %arg3: memref<1x128xf32, #tpu.memory_space<vmem>>, %arg4: memref<32x128xbf16, #tpu.memory_space<vmem>>, %arg5: memref<32x128xbf16, #tpu.memory_space<vmem>>, %arg6: memref<1x128xf32, #tpu.memory_space<vmem>>, %arg7: memref<32x128xbf16, #tpu.memory_space<vmem>>, %arg8: memref<1x128xf32, #tpu.memory_space<vmem>>, %arg9: memref<16x128xf32, #tpu.memory_space<vmem>>) attributes {dimension_semantics = [], scalar_prefetch = 0 : i64, scratch_operands = 0 : i64, tpu.core_type = #tpu.core_type<tc>} {
    %c0 = arith.constant 0 : index
    %c0_0 = arith.constant 0 : index
    %0 = vector.load %arg1[%c0, %c0_0] : memref<16x128xbf16, #tpu.memory_space<vmem>>, vector<16x128xbf16>
    %c0_1 = arith.constant 0 : index
    %c0_2 = arith.constant 0 : index
    %1 = vector.load %arg4[%c0_1, %c0_2] : memref<32x128xbf16, #tpu.memory_space<vmem>>, vector<32x128xbf16>
    %c0_3 = arith.constant 0 : index
    %c0_4 = arith.constant 0 : index
    %2 = vector.load %arg2[%c0_3, %c0_4] : memref<32x128xbf16, #tpu.memory_space<vmem>>, vector<32x128xbf16>
    %c0_5 = arith.constant 0 : index
    %c0_6 = arith.constant 0 : index
    %3 = vector.load %arg5[%c0_5, %c0_6] : memref<32x128xbf16, #tpu.memory_space<vmem>>, vector<32x128xbf16>
    %c0_7 = arith.constant 0 : index
    %c0_8 = arith.constant 0 : index
    %4 = vector.load %arg3[%c0_7, %c0_8] : memref<1x128xf32, #tpu.memory_space<vmem>>, vector<1x128xf32>
    %c0_9 = arith.constant 0 : index
    %c0_10 = arith.constant 0 : index
    %5 = vector.load %arg6[%c0_9, %c0_10] : memref<1x128xf32, #tpu.memory_space<vmem>>, vector<1x128xf32>
    %c0_11 = arith.constant 0 : index
    %c0_12 = arith.constant 0 : index
    %6 = vector.load %arg0[%c0_11, %c0_12] : memref<16x16xbf16, #tpu.memory_space<vmem>>, vector<16x16xbf16>
    %cst = arith.constant dense<0.000000e+00> : vector<16x128xf32>
    %7 = tpu.matmul %6, %0, %cst {dimension_numbers = #tpu.dot_dimension_numbers<[1], [0], [0], [1], [0, 0, 1, 1], [], []>} : vector<16x16xbf16>, vector<16x128xbf16>, vector<16x128xf32> -> vector<16x128xf32>
    %8 = vector.broadcast %4 : vector<1x128xf32> to vector<16x128xf32>
    %9 = arith.addf %7, %8 : vector<16x128xf32>
    %cst_13 = arith.constant 0.000000e+00 : f32
    %10 = vector.broadcast %cst_13 : f32 to vector<2x32xf32>
    %cst_14 = arith.constant 0.000000e+00 : f32
    %11 = vector.broadcast %cst_14 : f32 to vector<2x32xf32>
    %cst_15 = arith.constant 0.000000e+00 : f32
    %12 = vector.broadcast %cst_15 : f32 to vector<2x32xf32>
    %cst_16 = arith.constant 0.000000e+00 : f32
    %13 = vector.broadcast %cst_16 : f32 to vector<2x32xf32>
    %14 = vector.extract_strided_slice %9 {offsets = [0, 0], sizes = [2, 128], strides = [1, 1]} : vector<16x128xf32> to vector<2x128xf32>
    %15 = arith.truncf %10 : vector<2x32xf32> to vector<2x32xbf16>
    %cst_17 = arith.constant dense<0.000000e+00> : vector<2x128xf32>
    %16 = tpu.matmul %15, %2, %cst_17 {dimension_numbers = #tpu.dot_dimension_numbers<[1], [0], [0], [1], [0, 0, 1, 1], [], []>} : vector<2x32xbf16>, vector<32x128xbf16>, vector<2x128xf32> -> vector<2x128xf32>
    %17 = arith.addf %14, %16 : vector<2x128xf32>
    %18 = arith.negf %17 : vector<2x128xf32>
    %19 = math.exp %18 : vector<2x128xf32>
    %cst_18 = arith.constant 1.000000e+00 : f32
    %20 = vector.broadcast %cst_18 : f32 to vector<2x128xf32>
    %21 = arith.addf %20, %19 : vector<2x128xf32>
    %22 = arith.divf %20, %21 : vector<2x128xf32>
    %23 = math.tanh %17 : vector<2x128xf32>
    %24 = vector.extract_strided_slice %22 {offsets = [0, 0], sizes = [2, 32], strides = [1, 1]} : vector<2x128xf32> to vector<2x32xf32>
    %25 = vector.extract_strided_slice %22 {offsets = [0, 32], sizes = [2, 32], strides = [1, 1]} : vector<2x128xf32> to vector<2x32xf32>
    %26 = vector.extract_strided_slice %23 {offsets = [0, 64], sizes = [2, 32], strides = [1, 1]} : vector<2x128xf32> to vector<2x32xf32>
    %27 = vector.extract_strided_slice %22 {offsets = [0, 96], sizes = [2, 32], strides = [1, 1]} : vector<2x128xf32> to vector<2x32xf32>
    %28 = arith.mulf %25, %12 : vector<2x32xf32>
    %29 = arith.mulf %24, %26 : vector<2x32xf32>
    %30 = arith.addf %28, %29 : vector<2x32xf32>
    %31 = math.tanh %30 : vector<2x32xf32>
    %32 = arith.mulf %27, %31 : vector<2x32xf32>
    %33 = arith.truncf %32 : vector<2x32xf32> to vector<2x32xbf16>
    %cst_19 = arith.constant dense<0.000000e+00> : vector<2x128xf32>
    %34 = tpu.matmul %33, %1, %cst_19 {dimension_numbers = #tpu.dot_dimension_numbers<[1], [0], [0], [1], [0, 0, 1, 1], [], []>} : vector<2x32xbf16>, vector<32x128xbf16>, vector<2x128xf32> -> vector<2x128xf32>
    %35 = arith.truncf %11 : vector<2x32xf32> to vector<2x32xbf16>
    %cst_20 = arith.constant dense<0.000000e+00> : vector<2x128xf32>
    %36 = tpu.matmul %35, %3, %cst_20 {dimension_numbers = #tpu.dot_dimension_numbers<[1], [0], [0], [1], [0, 0, 1, 1], [], []>} : vector<2x32xbf16>, vector<32x128xbf16>, vector<2x128xf32> -> vector<2x128xf32>
    %37 = arith.addf %34, %36 : vector<2x128xf32>
    %38 = vector.broadcast %5 : vector<1x128xf32> to vector<2x128xf32>
    %39 = arith.addf %37, %38 : vector<2x128xf32>
    %40 = arith.negf %39 : vector<2x128xf32>
    %41 = math.exp %40 : vector<2x128xf32>
    %cst_21 = arith.constant 1.000000e+00 : f32
    %42 = vector.broadcast %cst_21 : f32 to vector<2x128xf32>
    %43 = arith.addf %42, %41 : vector<2x128xf32>
    %44 = arith.divf %42, %43 : vector<2x128xf32>
    %45 = math.tanh %39 : vector<2x128xf32>
    %46 = vector.extract_strided_slice %44 {offsets = [0, 0], sizes = [2, 32], strides = [1, 1]} : vector<2x128xf32> to vector<2x32xf32>
    %47 = vector.extract_strided_slice %44 {offsets = [0, 32], sizes = [2, 32], strides = [1, 1]} : vector<2x128xf32> to vector<2x32xf32>
    %48 = vector.extract_strided_slice %45 {offsets = [0, 64], sizes = [2, 32], strides = [1, 1]} : vector<2x128xf32> to vector<2x32xf32>
    %49 = vector.extract_strided_slice %44 {offsets = [0, 96], sizes = [2, 32], strides = [1, 1]} : vector<2x128xf32> to vector<2x32xf32>
    %50 = arith.mulf %47, %13 : vector<2x32xf32>
    %51 = arith.mulf %46, %48 : vector<2x32xf32>
    %52 = arith.addf %50, %51 : vector<2x32xf32>
    %53 = math.tanh %52 : vector<2x32xf32>
    %54 = arith.mulf %49, %53 : vector<2x32xf32>
    %55 = vector.extract_strided_slice %9 {offsets = [2, 0], sizes = [2, 128], strides = [1, 1]} : vector<16x128xf32> to vector<2x128xf32>
    %56 = arith.truncf %32 : vector<2x32xf32> to vector<2x32xbf16>
    %cst_22 = arith.constant dense<0.000000e+00> : vector<2x128xf32>
    %57 = tpu.matmul %56, %2, %cst_22 {dimension_numbers = #tpu.dot_dimension_numbers<[1], [0], [0], [1], [0, 0, 1, 1], [], []>} : vector<2x32xbf16>, vector<32x128xbf16>, vector<2x128xf32> -> vector<2x128xf32>
    %58 = arith.addf %55, %57 : vector<2x128xf32>
    %59 = arith.negf %58 : vector<2x128xf32>
    %60 = math.exp %59 : vector<2x128xf32>
    %cst_23 = arith.constant 1.000000e+00 : f32
    %61 = vector.broadcast %cst_23 : f32 to vector<2x128xf32>
    %62 = arith.addf %61, %60 : vector<2x128xf32>
    %63 = arith.divf %61, %62 : vector<2x128xf32>
    %64 = math.tanh %58 : vector<2x128xf32>
    %65 = vector.extract_strided_slice %63 {offsets = [0, 0], sizes = [2, 32], strides = [1, 1]} : vector<2x128xf32> to vector<2x32xf32>
    %66 = vector.extract_strided_slice %63 {offsets = [0, 32], sizes = [2, 32], strides = [1, 1]} : vector<2x128xf32> to vector<2x32xf32>
    %67 = vector.extract_strided_slice %64 {offsets = [0, 64], sizes = [2, 32], strides = [1, 1]} : vector<2x128xf32> to vector<2x32xf32>
    %68 = vector.extract_strided_slice %63 {offsets = [0, 96], sizes = [2, 32], strides = [1, 1]} : vector<2x128xf32> to vector<2x32xf32>
    %69 = arith.mulf %66, %30 : vector<2x32xf32>
    %70 = arith.mulf %65, %67 : vector<2x32xf32>
    %71 = arith.addf %69, %70 : vector<2x32xf32>
    %72 = math.tanh %71 : vector<2x32xf32>
    %73 = arith.mulf %68, %72 : vector<2x32xf32>
    %74 = arith.truncf %73 : vector<2x32xf32> to vector<2x32xbf16>
    %cst_24 = arith.constant dense<0.000000e+00> : vector<2x128xf32>
    %75 = tpu.matmul %74, %1, %cst_24 {dimension_numbers = #tpu.dot_dimension_numbers<[1], [0], [0], [1], [0, 0, 1, 1], [], []>} : vector<2x32xbf16>, vector<32x128xbf16>, vector<2x128xf32> -> vector<2x128xf32>
    %76 = arith.truncf %54 : vector<2x32xf32> to vector<2x32xbf16>
    %cst_25 = arith.constant dense<0.000000e+00> : vector<2x128xf32>
    %77 = tpu.matmul %76, %3, %cst_25 {dimension_numbers = #tpu.dot_dimension_numbers<[1], [0], [0], [1], [0, 0, 1, 1], [], []>} : vector<2x32xbf16>, vector<32x128xbf16>, vector<2x128xf32> -> vector<2x128xf32>
    %78 = arith.addf %75, %77 : vector<2x128xf32>
    %79 = vector.broadcast %5 : vector<1x128xf32> to vector<2x128xf32>
    %80 = arith.addf %78, %79 : vector<2x128xf32>
    %81 = arith.negf %80 : vector<2x128xf32>
    %82 = math.exp %81 : vector<2x128xf32>
    %cst_26 = arith.constant 1.000000e+00 : f32
    %83 = vector.broadcast %cst_26 : f32 to vector<2x128xf32>
    %84 = arith.addf %83, %82 : vector<2x128xf32>
    %85 = arith.divf %83, %84 : vector<2x128xf32>
    %86 = math.tanh %80 : vector<2x128xf32>
    %87 = vector.extract_strided_slice %85 {offsets = [0, 0], sizes = [2, 32], strides = [1, 1]} : vector<2x128xf32> to vector<2x32xf32>
    %88 = vector.extract_strided_slice %85 {offsets = [0, 32], sizes = [2, 32], strides = [1, 1]} : vector<2x128xf32> to vector<2x32xf32>
    %89 = vector.extract_strided_slice %86 {offsets = [0, 64], sizes = [2, 32], strides = [1, 1]} : vector<2x128xf32> to vector<2x32xf32>
    %90 = vector.extract_strided_slice %85 {offsets = [0, 96], sizes = [2, 32], strides = [1, 1]} : vector<2x128xf32> to vector<2x32xf32>
    %91 = arith.mulf %88, %52 : vector<2x32xf32>
    %92 = arith.mulf %87, %89 : vector<2x32xf32>
    %93 = arith.addf %91, %92 : vector<2x32xf32>
    %94 = math.tanh %93 : vector<2x32xf32>
    %95 = arith.mulf %90, %94 : vector<2x32xf32>
    %96 = vector.extract_strided_slice %9 {offsets = [4, 0], sizes = [2, 128], strides = [1, 1]} : vector<16x128xf32> to vector<2x128xf32>
    %97 = arith.truncf %73 : vector<2x32xf32> to vector<2x32xbf16>
    %cst_27 = arith.constant dense<0.000000e+00> : vector<2x128xf32>
    %98 = tpu.matmul %97, %2, %cst_27 {dimension_numbers = #tpu.dot_dimension_numbers<[1], [0], [0], [1], [0, 0, 1, 1], [], []>} : vector<2x32xbf16>, vector<32x128xbf16>, vector<2x128xf32> -> vector<2x128xf32>
    %99 = arith.addf %96, %98 : vector<2x128xf32>
    %100 = arith.negf %99 : vector<2x128xf32>
    %101 = math.exp %100 : vector<2x128xf32>
    %cst_28 = arith.constant 1.000000e+00 : f32
    %102 = vector.broadcast %cst_28 : f32 to vector<2x128xf32>
    %103 = arith.addf %102, %101 : vector<2x128xf32>
    %104 = arith.divf %102, %103 : vector<2x128xf32>
    %105 = math.tanh %99 : vector<2x128xf32>
    %106 = vector.extract_strided_slice %104 {offsets = [0, 0], sizes = [2, 32], strides = [1, 1]} : vector<2x128xf32> to vector<2x32xf32>
    %107 = vector.extract_strided_slice %104 {offsets = [0, 32], sizes = [2, 32], strides = [1, 1]} : vector<2x128xf32> to vector<2x32xf32>
    %108 = vector.extract_strided_slice %105 {offsets = [0, 64], sizes = [2, 32], strides = [1, 1]} : vector<2x128xf32> to vector<2x32xf32>
    %109 = vector.extract_strided_slice %104 {offsets = [0, 96], sizes = [2, 32], strides = [1, 1]} : vector<2x128xf32> to vector<2x32xf32>
    %110 = arith.mulf %107, %71 : vector<2x32xf32>
    %111 = arith.mulf %106, %108 : vector<2x32xf32>
    %112 = arith.addf %110, %111 : vector<2x32xf32>
    %113 = math.tanh %112 : vector<2x32xf32>
    %114 = arith.mulf %109, %113 : vector<2x32xf32>
    %115 = arith.truncf %114 : vector<2x32xf32> to vector<2x32xbf16>
    %cst_29 = arith.constant dense<0.000000e+00> : vector<2x128xf32>
    %116 = tpu.matmul %115, %1, %cst_29 {dimension_numbers = #tpu.dot_dimension_numbers<[1], [0], [0], [1], [0, 0, 1, 1], [], []>} : vector<2x32xbf16>, vector<32x128xbf16>, vector<2x128xf32> -> vector<2x128xf32>
    %117 = arith.truncf %95 : vector<2x32xf32> to vector<2x32xbf16>
    %cst_30 = arith.constant dense<0.000000e+00> : vector<2x128xf32>
    %118 = tpu.matmul %117, %3, %cst_30 {dimension_numbers = #tpu.dot_dimension_numbers<[1], [0], [0], [1], [0, 0, 1, 1], [], []>} : vector<2x32xbf16>, vector<32x128xbf16>, vector<2x128xf32> -> vector<2x128xf32>
    %119 = arith.addf %116, %118 : vector<2x128xf32>
    %120 = vector.broadcast %5 : vector<1x128xf32> to vector<2x128xf32>
    %121 = arith.addf %119, %120 : vector<2x128xf32>
    %122 = arith.negf %121 : vector<2x128xf32>
    %123 = math.exp %122 : vector<2x128xf32>
    %cst_31 = arith.constant 1.000000e+00 : f32
    %124 = vector.broadcast %cst_31 : f32 to vector<2x128xf32>
    %125 = arith.addf %124, %123 : vector<2x128xf32>
    %126 = arith.divf %124, %125 : vector<2x128xf32>
    %127 = math.tanh %121 : vector<2x128xf32>
    %128 = vector.extract_strided_slice %126 {offsets = [0, 0], sizes = [2, 32], strides = [1, 1]} : vector<2x128xf32> to vector<2x32xf32>
    %129 = vector.extract_strided_slice %126 {offsets = [0, 32], sizes = [2, 32], strides = [1, 1]} : vector<2x128xf32> to vector<2x32xf32>
    %130 = vector.extract_strided_slice %127 {offsets = [0, 64], sizes = [2, 32], strides = [1, 1]} : vector<2x128xf32> to vector<2x32xf32>
    %131 = vector.extract_strided_slice %126 {offsets = [0, 96], sizes = [2, 32], strides = [1, 1]} : vector<2x128xf32> to vector<2x32xf32>
    %132 = arith.mulf %129, %93 : vector<2x32xf32>
    %133 = arith.mulf %128, %130 : vector<2x32xf32>
    %134 = arith.addf %132, %133 : vector<2x32xf32>
    %135 = math.tanh %134 : vector<2x32xf32>
    %136 = arith.mulf %131, %135 : vector<2x32xf32>
    %137 = vector.extract_strided_slice %9 {offsets = [6, 0], sizes = [2, 128], strides = [1, 1]} : vector<16x128xf32> to vector<2x128xf32>
    %138 = arith.truncf %114 : vector<2x32xf32> to vector<2x32xbf16>
    %cst_32 = arith.constant dense<0.000000e+00> : vector<2x128xf32>
    %139 = tpu.matmul %138, %2, %cst_32 {dimension_numbers = #tpu.dot_dimension_numbers<[1], [0], [0], [1], [0, 0, 1, 1], [], []>} : vector<2x32xbf16>, vector<32x128xbf16>, vector<2x128xf32> -> vector<2x128xf32>
    %140 = arith.addf %137, %139 : vector<2x128xf32>
    %141 = arith.negf %140 : vector<2x128xf32>
    %142 = math.exp %141 : vector<2x128xf32>
    %cst_33 = arith.constant 1.000000e+00 : f32
    %143 = vector.broadcast %cst_33 : f32 to vector<2x128xf32>
    %144 = arith.addf %143, %142 : vector<2x128xf32>
    %145 = arith.divf %143, %144 : vector<2x128xf32>
    %146 = math.tanh %140 : vector<2x128xf32>
    %147 = vector.extract_strided_slice %145 {offsets = [0, 0], sizes = [2, 32], strides = [1, 1]} : vector<2x128xf32> to vector<2x32xf32>
    %148 = vector.extract_strided_slice %145 {offsets = [0, 32], sizes = [2, 32], strides = [1, 1]} : vector<2x128xf32> to vector<2x32xf32>
    %149 = vector.extract_strided_slice %146 {offsets = [0, 64], sizes = [2, 32], strides = [1, 1]} : vector<2x128xf32> to vector<2x32xf32>
    %150 = vector.extract_strided_slice %145 {offsets = [0, 96], sizes = [2, 32], strides = [1, 1]} : vector<2x128xf32> to vector<2x32xf32>
    %151 = arith.mulf %148, %112 : vector<2x32xf32>
    %152 = arith.mulf %147, %149 : vector<2x32xf32>
    %153 = arith.addf %151, %152 : vector<2x32xf32>
    %154 = math.tanh %153 : vector<2x32xf32>
    %155 = arith.mulf %150, %154 : vector<2x32xf32>
    %156 = arith.truncf %155 : vector<2x32xf32> to vector<2x32xbf16>
    %cst_34 = arith.constant dense<0.000000e+00> : vector<2x128xf32>
    %157 = tpu.matmul %156, %1, %cst_34 {dimension_numbers = #tpu.dot_dimension_numbers<[1], [0], [0], [1], [0, 0, 1, 1], [], []>} : vector<2x32xbf16>, vector<32x128xbf16>, vector<2x128xf32> -> vector<2x128xf32>
    %158 = arith.truncf %136 : vector<2x32xf32> to vector<2x32xbf16>
    %cst_35 = arith.constant dense<0.000000e+00> : vector<2x128xf32>
    %159 = tpu.matmul %158, %3, %cst_35 {dimension_numbers = #tpu.dot_dimension_numbers<[1], [0], [0], [1], [0, 0, 1, 1], [], []>} : vector<2x32xbf16>, vector<32x128xbf16>, vector<2x128xf32> -> vector<2x128xf32>
    %160 = arith.addf %157, %159 : vector<2x128xf32>
    %161 = vector.broadcast %5 : vector<1x128xf32> to vector<2x128xf32>
    %162 = arith.addf %160, %161 : vector<2x128xf32>
    %163 = arith.negf %162 : vector<2x128xf32>
    %164 = math.exp %163 : vector<2x128xf32>
    %cst_36 = arith.constant 1.000000e+00 : f32
    %165 = vector.broadcast %cst_36 : f32 to vector<2x128xf32>
    %166 = arith.addf %165, %164 : vector<2x128xf32>
    %167 = arith.divf %165, %166 : vector<2x128xf32>
    %168 = math.tanh %162 : vector<2x128xf32>
    %169 = vector.extract_strided_slice %167 {offsets = [0, 0], sizes = [2, 32], strides = [1, 1]} : vector<2x128xf32> to vector<2x32xf32>
    %170 = vector.extract_strided_slice %167 {offsets = [0, 32], sizes = [2, 32], strides = [1, 1]} : vector<2x128xf32> to vector<2x32xf32>
    %171 = vector.extract_strided_slice %168 {offsets = [0, 64], sizes = [2, 32], strides = [1, 1]} : vector<2x128xf32> to vector<2x32xf32>
    %172 = vector.extract_strided_slice %167 {offsets = [0, 96], sizes = [2, 32], strides = [1, 1]} : vector<2x128xf32> to vector<2x32xf32>
    %173 = arith.mulf %170, %134 : vector<2x32xf32>
    %174 = arith.mulf %169, %171 : vector<2x32xf32>
    %175 = arith.addf %173, %174 : vector<2x32xf32>
    %176 = math.tanh %175 : vector<2x32xf32>
    %177 = arith.mulf %172, %176 : vector<2x32xf32>
    %178 = vector.extract_strided_slice %9 {offsets = [8, 0], sizes = [2, 128], strides = [1, 1]} : vector<16x128xf32> to vector<2x128xf32>
    %179 = arith.truncf %155 : vector<2x32xf32> to vector<2x32xbf16>
    %cst_37 = arith.constant dense<0.000000e+00> : vector<2x128xf32>
    %180 = tpu.matmul %179, %2, %cst_37 {dimension_numbers = #tpu.dot_dimension_numbers<[1], [0], [0], [1], [0, 0, 1, 1], [], []>} : vector<2x32xbf16>, vector<32x128xbf16>, vector<2x128xf32> -> vector<2x128xf32>
    %181 = arith.addf %178, %180 : vector<2x128xf32>
    %182 = arith.negf %181 : vector<2x128xf32>
    %183 = math.exp %182 : vector<2x128xf32>
    %cst_38 = arith.constant 1.000000e+00 : f32
    %184 = vector.broadcast %cst_38 : f32 to vector<2x128xf32>
    %185 = arith.addf %184, %183 : vector<2x128xf32>
    %186 = arith.divf %184, %185 : vector<2x128xf32>
    %187 = math.tanh %181 : vector<2x128xf32>
    %188 = vector.extract_strided_slice %186 {offsets = [0, 0], sizes = [2, 32], strides = [1, 1]} : vector<2x128xf32> to vector<2x32xf32>
    %189 = vector.extract_strided_slice %186 {offsets = [0, 32], sizes = [2, 32], strides = [1, 1]} : vector<2x128xf32> to vector<2x32xf32>
    %190 = vector.extract_strided_slice %187 {offsets = [0, 64], sizes = [2, 32], strides = [1, 1]} : vector<2x128xf32> to vector<2x32xf32>
    %191 = vector.extract_strided_slice %186 {offsets = [0, 96], sizes = [2, 32], strides = [1, 1]} : vector<2x128xf32> to vector<2x32xf32>
    %192 = arith.mulf %189, %153 : vector<2x32xf32>
    %193 = arith.mulf %188, %190 : vector<2x32xf32>
    %194 = arith.addf %192, %193 : vector<2x32xf32>
    %195 = math.tanh %194 : vector<2x32xf32>
    %196 = arith.mulf %191, %195 : vector<2x32xf32>
    %197 = arith.truncf %196 : vector<2x32xf32> to vector<2x32xbf16>
    %cst_39 = arith.constant dense<0.000000e+00> : vector<2x128xf32>
    %198 = tpu.matmul %197, %1, %cst_39 {dimension_numbers = #tpu.dot_dimension_numbers<[1], [0], [0], [1], [0, 0, 1, 1], [], []>} : vector<2x32xbf16>, vector<32x128xbf16>, vector<2x128xf32> -> vector<2x128xf32>
    %199 = arith.truncf %177 : vector<2x32xf32> to vector<2x32xbf16>
    %cst_40 = arith.constant dense<0.000000e+00> : vector<2x128xf32>
    %200 = tpu.matmul %199, %3, %cst_40 {dimension_numbers = #tpu.dot_dimension_numbers<[1], [0], [0], [1], [0, 0, 1, 1], [], []>} : vector<2x32xbf16>, vector<32x128xbf16>, vector<2x128xf32> -> vector<2x128xf32>
    %201 = arith.addf %198, %200 : vector<2x128xf32>
    %202 = vector.broadcast %5 : vector<1x128xf32> to vector<2x128xf32>
    %203 = arith.addf %201, %202 : vector<2x128xf32>
    %204 = arith.negf %203 : vector<2x128xf32>
    %205 = math.exp %204 : vector<2x128xf32>
    %cst_41 = arith.constant 1.000000e+00 : f32
    %206 = vector.broadcast %cst_41 : f32 to vector<2x128xf32>
    %207 = arith.addf %206, %205 : vector<2x128xf32>
    %208 = arith.divf %206, %207 : vector<2x128xf32>
    %209 = math.tanh %203 : vector<2x128xf32>
    %210 = vector.extract_strided_slice %208 {offsets = [0, 0], sizes = [2, 32], strides = [1, 1]} : vector<2x128xf32> to vector<2x32xf32>
    %211 = vector.extract_strided_slice %208 {offsets = [0, 32], sizes = [2, 32], strides = [1, 1]} : vector<2x128xf32> to vector<2x32xf32>
    %212 = vector.extract_strided_slice %209 {offsets = [0, 64], sizes = [2, 32], strides = [1, 1]} : vector<2x128xf32> to vector<2x32xf32>
    %213 = vector.extract_strided_slice %208 {offsets = [0, 96], sizes = [2, 32], strides = [1, 1]} : vector<2x128xf32> to vector<2x32xf32>
    %214 = arith.mulf %211, %175 : vector<2x32xf32>
    %215 = arith.mulf %210, %212 : vector<2x32xf32>
    %216 = arith.addf %214, %215 : vector<2x32xf32>
    %217 = math.tanh %216 : vector<2x32xf32>
    %218 = arith.mulf %213, %217 : vector<2x32xf32>
    %219 = vector.extract_strided_slice %9 {offsets = [10, 0], sizes = [2, 128], strides = [1, 1]} : vector<16x128xf32> to vector<2x128xf32>
    %220 = arith.truncf %196 : vector<2x32xf32> to vector<2x32xbf16>
    %cst_42 = arith.constant dense<0.000000e+00> : vector<2x128xf32>
    %221 = tpu.matmul %220, %2, %cst_42 {dimension_numbers = #tpu.dot_dimension_numbers<[1], [0], [0], [1], [0, 0, 1, 1], [], []>} : vector<2x32xbf16>, vector<32x128xbf16>, vector<2x128xf32> -> vector<2x128xf32>
    %222 = arith.addf %219, %221 : vector<2x128xf32>
    %223 = arith.negf %222 : vector<2x128xf32>
    %224 = math.exp %223 : vector<2x128xf32>
    %cst_43 = arith.constant 1.000000e+00 : f32
    %225 = vector.broadcast %cst_43 : f32 to vector<2x128xf32>
    %226 = arith.addf %225, %224 : vector<2x128xf32>
    %227 = arith.divf %225, %226 : vector<2x128xf32>
    %228 = math.tanh %222 : vector<2x128xf32>
    %229 = vector.extract_strided_slice %227 {offsets = [0, 0], sizes = [2, 32], strides = [1, 1]} : vector<2x128xf32> to vector<2x32xf32>
    %230 = vector.extract_strided_slice %227 {offsets = [0, 32], sizes = [2, 32], strides = [1, 1]} : vector<2x128xf32> to vector<2x32xf32>
    %231 = vector.extract_strided_slice %228 {offsets = [0, 64], sizes = [2, 32], strides = [1, 1]} : vector<2x128xf32> to vector<2x32xf32>
    %232 = vector.extract_strided_slice %227 {offsets = [0, 96], sizes = [2, 32], strides = [1, 1]} : vector<2x128xf32> to vector<2x32xf32>
    %233 = arith.mulf %230, %194 : vector<2x32xf32>
    %234 = arith.mulf %229, %231 : vector<2x32xf32>
    %235 = arith.addf %233, %234 : vector<2x32xf32>
    %236 = math.tanh %235 : vector<2x32xf32>
    %237 = arith.mulf %232, %236 : vector<2x32xf32>
    %238 = arith.truncf %237 : vector<2x32xf32> to vector<2x32xbf16>
    %cst_44 = arith.constant dense<0.000000e+00> : vector<2x128xf32>
    %239 = tpu.matmul %238, %1, %cst_44 {dimension_numbers = #tpu.dot_dimension_numbers<[1], [0], [0], [1], [0, 0, 1, 1], [], []>} : vector<2x32xbf16>, vector<32x128xbf16>, vector<2x128xf32> -> vector<2x128xf32>
    %240 = arith.truncf %218 : vector<2x32xf32> to vector<2x32xbf16>
    %cst_45 = arith.constant dense<0.000000e+00> : vector<2x128xf32>
    %241 = tpu.matmul %240, %3, %cst_45 {dimension_numbers = #tpu.dot_dimension_numbers<[1], [0], [0], [1], [0, 0, 1, 1], [], []>} : vector<2x32xbf16>, vector<32x128xbf16>, vector<2x128xf32> -> vector<2x128xf32>
    %242 = arith.addf %239, %241 : vector<2x128xf32>
    %243 = vector.broadcast %5 : vector<1x128xf32> to vector<2x128xf32>
    %244 = arith.addf %242, %243 : vector<2x128xf32>
    %245 = arith.negf %244 : vector<2x128xf32>
    %246 = math.exp %245 : vector<2x128xf32>
    %cst_46 = arith.constant 1.000000e+00 : f32
    %247 = vector.broadcast %cst_46 : f32 to vector<2x128xf32>
    %248 = arith.addf %247, %246 : vector<2x128xf32>
    %249 = arith.divf %247, %248 : vector<2x128xf32>
    %250 = math.tanh %244 : vector<2x128xf32>
    %251 = vector.extract_strided_slice %249 {offsets = [0, 0], sizes = [2, 32], strides = [1, 1]} : vector<2x128xf32> to vector<2x32xf32>
    %252 = vector.extract_strided_slice %249 {offsets = [0, 32], sizes = [2, 32], strides = [1, 1]} : vector<2x128xf32> to vector<2x32xf32>
    %253 = vector.extract_strided_slice %250 {offsets = [0, 64], sizes = [2, 32], strides = [1, 1]} : vector<2x128xf32> to vector<2x32xf32>
    %254 = vector.extract_strided_slice %249 {offsets = [0, 96], sizes = [2, 32], strides = [1, 1]} : vector<2x128xf32> to vector<2x32xf32>
    %255 = arith.mulf %252, %216 : vector<2x32xf32>
    %256 = arith.mulf %251, %253 : vector<2x32xf32>
    %257 = arith.addf %255, %256 : vector<2x32xf32>
    %258 = math.tanh %257 : vector<2x32xf32>
    %259 = arith.mulf %254, %258 : vector<2x32xf32>
    %260 = vector.extract_strided_slice %9 {offsets = [12, 0], sizes = [2, 128], strides = [1, 1]} : vector<16x128xf32> to vector<2x128xf32>
    %261 = arith.truncf %237 : vector<2x32xf32> to vector<2x32xbf16>
    %cst_47 = arith.constant dense<0.000000e+00> : vector<2x128xf32>
    %262 = tpu.matmul %261, %2, %cst_47 {dimension_numbers = #tpu.dot_dimension_numbers<[1], [0], [0], [1], [0, 0, 1, 1], [], []>} : vector<2x32xbf16>, vector<32x128xbf16>, vector<2x128xf32> -> vector<2x128xf32>
    %263 = arith.addf %260, %262 : vector<2x128xf32>
    %264 = arith.negf %263 : vector<2x128xf32>
    %265 = math.exp %264 : vector<2x128xf32>
    %cst_48 = arith.constant 1.000000e+00 : f32
    %266 = vector.broadcast %cst_48 : f32 to vector<2x128xf32>
    %267 = arith.addf %266, %265 : vector<2x128xf32>
    %268 = arith.divf %266, %267 : vector<2x128xf32>
    %269 = math.tanh %263 : vector<2x128xf32>
    %270 = vector.extract_strided_slice %268 {offsets = [0, 0], sizes = [2, 32], strides = [1, 1]} : vector<2x128xf32> to vector<2x32xf32>
    %271 = vector.extract_strided_slice %268 {offsets = [0, 32], sizes = [2, 32], strides = [1, 1]} : vector<2x128xf32> to vector<2x32xf32>
    %272 = vector.extract_strided_slice %269 {offsets = [0, 64], sizes = [2, 32], strides = [1, 1]} : vector<2x128xf32> to vector<2x32xf32>
    %273 = vector.extract_strided_slice %268 {offsets = [0, 96], sizes = [2, 32], strides = [1, 1]} : vector<2x128xf32> to vector<2x32xf32>
    %274 = arith.mulf %271, %235 : vector<2x32xf32>
    %275 = arith.mulf %270, %272 : vector<2x32xf32>
    %276 = arith.addf %274, %275 : vector<2x32xf32>
    %277 = math.tanh %276 : vector<2x32xf32>
    %278 = arith.mulf %273, %277 : vector<2x32xf32>
    %279 = arith.truncf %278 : vector<2x32xf32> to vector<2x32xbf16>
    %cst_49 = arith.constant dense<0.000000e+00> : vector<2x128xf32>
    %280 = tpu.matmul %279, %1, %cst_49 {dimension_numbers = #tpu.dot_dimension_numbers<[1], [0], [0], [1], [0, 0, 1, 1], [], []>} : vector<2x32xbf16>, vector<32x128xbf16>, vector<2x128xf32> -> vector<2x128xf32>
    %281 = arith.truncf %259 : vector<2x32xf32> to vector<2x32xbf16>
    %cst_50 = arith.constant dense<0.000000e+00> : vector<2x128xf32>
    %282 = tpu.matmul %281, %3, %cst_50 {dimension_numbers = #tpu.dot_dimension_numbers<[1], [0], [0], [1], [0, 0, 1, 1], [], []>} : vector<2x32xbf16>, vector<32x128xbf16>, vector<2x128xf32> -> vector<2x128xf32>
    %283 = arith.addf %280, %282 : vector<2x128xf32>
    %284 = vector.broadcast %5 : vector<1x128xf32> to vector<2x128xf32>
    %285 = arith.addf %283, %284 : vector<2x128xf32>
    %286 = arith.negf %285 : vector<2x128xf32>
    %287 = math.exp %286 : vector<2x128xf32>
    %cst_51 = arith.constant 1.000000e+00 : f32
    %288 = vector.broadcast %cst_51 : f32 to vector<2x128xf32>
    %289 = arith.addf %288, %287 : vector<2x128xf32>
    %290 = arith.divf %288, %289 : vector<2x128xf32>
    %291 = math.tanh %285 : vector<2x128xf32>
    %292 = vector.extract_strided_slice %290 {offsets = [0, 0], sizes = [2, 32], strides = [1, 1]} : vector<2x128xf32> to vector<2x32xf32>
    %293 = vector.extract_strided_slice %290 {offsets = [0, 32], sizes = [2, 32], strides = [1, 1]} : vector<2x128xf32> to vector<2x32xf32>
    %294 = vector.extract_strided_slice %291 {offsets = [0, 64], sizes = [2, 32], strides = [1, 1]} : vector<2x128xf32> to vector<2x32xf32>
    %295 = vector.extract_strided_slice %290 {offsets = [0, 96], sizes = [2, 32], strides = [1, 1]} : vector<2x128xf32> to vector<2x32xf32>
    %296 = arith.mulf %293, %257 : vector<2x32xf32>
    %297 = arith.mulf %292, %294 : vector<2x32xf32>
    %298 = arith.addf %296, %297 : vector<2x32xf32>
    %299 = math.tanh %298 : vector<2x32xf32>
    %300 = arith.mulf %295, %299 : vector<2x32xf32>
    %301 = vector.extract_strided_slice %9 {offsets = [14, 0], sizes = [2, 128], strides = [1, 1]} : vector<16x128xf32> to vector<2x128xf32>
    %302 = arith.truncf %278 : vector<2x32xf32> to vector<2x32xbf16>
    %cst_52 = arith.constant dense<0.000000e+00> : vector<2x128xf32>
    %303 = tpu.matmul %302, %2, %cst_52 {dimension_numbers = #tpu.dot_dimension_numbers<[1], [0], [0], [1], [0, 0, 1, 1], [], []>} : vector<2x32xbf16>, vector<32x128xbf16>, vector<2x128xf32> -> vector<2x128xf32>
    %304 = arith.addf %301, %303 : vector<2x128xf32>
    %305 = arith.negf %304 : vector<2x128xf32>
    %306 = math.exp %305 : vector<2x128xf32>
    %cst_53 = arith.constant 1.000000e+00 : f32
    %307 = vector.broadcast %cst_53 : f32 to vector<2x128xf32>
    %308 = arith.addf %307, %306 : vector<2x128xf32>
    %309 = arith.divf %307, %308 : vector<2x128xf32>
    %310 = math.tanh %304 : vector<2x128xf32>
    %311 = vector.extract_strided_slice %309 {offsets = [0, 0], sizes = [2, 32], strides = [1, 1]} : vector<2x128xf32> to vector<2x32xf32>
    %312 = vector.extract_strided_slice %309 {offsets = [0, 32], sizes = [2, 32], strides = [1, 1]} : vector<2x128xf32> to vector<2x32xf32>
    %313 = vector.extract_strided_slice %310 {offsets = [0, 64], sizes = [2, 32], strides = [1, 1]} : vector<2x128xf32> to vector<2x32xf32>
    %314 = vector.extract_strided_slice %309 {offsets = [0, 96], sizes = [2, 32], strides = [1, 1]} : vector<2x128xf32> to vector<2x32xf32>
    %315 = arith.mulf %312, %276 : vector<2x32xf32>
    %316 = arith.mulf %311, %313 : vector<2x32xf32>
    %317 = arith.addf %315, %316 : vector<2x32xf32>
    %318 = math.tanh %317 : vector<2x32xf32>
    %319 = arith.mulf %314, %318 : vector<2x32xf32>
    %320 = arith.truncf %319 : vector<2x32xf32> to vector<2x32xbf16>
    %cst_54 = arith.constant dense<0.000000e+00> : vector<2x128xf32>
    %321 = tpu.matmul %320, %1, %cst_54 {dimension_numbers = #tpu.dot_dimension_numbers<[1], [0], [0], [1], [0, 0, 1, 1], [], []>} : vector<2x32xbf16>, vector<32x128xbf16>, vector<2x128xf32> -> vector<2x128xf32>
    %322 = arith.truncf %300 : vector<2x32xf32> to vector<2x32xbf16>
    %cst_55 = arith.constant dense<0.000000e+00> : vector<2x128xf32>
    %323 = tpu.matmul %322, %3, %cst_55 {dimension_numbers = #tpu.dot_dimension_numbers<[1], [0], [0], [1], [0, 0, 1, 1], [], []>} : vector<2x32xbf16>, vector<32x128xbf16>, vector<2x128xf32> -> vector<2x128xf32>
    %324 = arith.addf %321, %323 : vector<2x128xf32>
    %325 = vector.broadcast %5 : vector<1x128xf32> to vector<2x128xf32>
    %326 = arith.addf %324, %325 : vector<2x128xf32>
    %327 = arith.negf %326 : vector<2x128xf32>
    %328 = math.exp %327 : vector<2x128xf32>
    %cst_56 = arith.constant 1.000000e+00 : f32
    %329 = vector.broadcast %cst_56 : f32 to vector<2x128xf32>
    %330 = arith.addf %329, %328 : vector<2x128xf32>
    %331 = arith.divf %329, %330 : vector<2x128xf32>
    %332 = math.tanh %326 : vector<2x128xf32>
    %333 = vector.extract_strided_slice %331 {offsets = [0, 0], sizes = [2, 32], strides = [1, 1]} : vector<2x128xf32> to vector<2x32xf32>
    %334 = vector.extract_strided_slice %331 {offsets = [0, 32], sizes = [2, 32], strides = [1, 1]} : vector<2x128xf32> to vector<2x32xf32>
    %335 = vector.extract_strided_slice %332 {offsets = [0, 64], sizes = [2, 32], strides = [1, 1]} : vector<2x128xf32> to vector<2x32xf32>
    %336 = vector.extract_strided_slice %331 {offsets = [0, 96], sizes = [2, 32], strides = [1, 1]} : vector<2x128xf32> to vector<2x32xf32>
    %337 = arith.mulf %334, %298 : vector<2x32xf32>
    %338 = arith.mulf %333, %335 : vector<2x32xf32>
    %339 = arith.addf %337, %338 : vector<2x32xf32>
    %340 = math.tanh %339 : vector<2x32xf32>
    %341 = arith.mulf %336, %340 : vector<2x32xf32>
    %342 = tpu.concatenate %54, %95, %136, %177, %218, %259, %300, %341 in 0 : vector<2x32xf32>, vector<2x32xf32>, vector<2x32xf32>, vector<2x32xf32>, vector<2x32xf32>, vector<2x32xf32>, vector<2x32xf32>, vector<2x32xf32> -> vector<16x32xf32>
    %343 = arith.truncf %342 : vector<16x32xf32> to vector<16x32xbf16>
    %c0_57 = arith.constant 0 : index
    %c0_58 = arith.constant 0 : index
    %344 = vector.load %arg7[%c0_57, %c0_58] : memref<32x128xbf16, #tpu.memory_space<vmem>>, vector<32x128xbf16>
    %cst_59 = arith.constant dense<0.000000e+00> : vector<16x128xf32>
    %345 = tpu.matmul %343, %344, %cst_59 {dimension_numbers = #tpu.dot_dimension_numbers<[1], [0], [0], [1], [0, 0, 1, 1], [], []>} : vector<16x32xbf16>, vector<32x128xbf16>, vector<16x128xf32> -> vector<16x128xf32>
    %c0_60 = arith.constant 0 : index
    %c0_61 = arith.constant 0 : index
    %346 = vector.load %arg8[%c0_60, %c0_61] : memref<1x128xf32, #tpu.memory_space<vmem>>, vector<1x128xf32>
    %347 = vector.broadcast %346 : vector<1x128xf32> to vector<16x128xf32>
    %348 = arith.addf %345, %347 : vector<16x128xf32>
    %c0_62 = arith.constant 0 : index
    %c0_63 = arith.constant 0 : index
    %349 = vector.load %arg9[%c0_62, %c0_63] : memref<16x128xf32, #tpu.memory_space<vmem>>, vector<16x128xf32>
    tpu.vector_store %arg9[%c0_62, %c0_63], %348 {strides = array<i32>} : memref<16x128xf32, #tpu.memory_space<vmem>>, vector<16x128xf32>,
    return
  }
}

</mosaic_0001>

<llo_original>
// kernel: lstmwrapper2_forward.1
$region0: #{lstmwrapper2_forward.1}
  #allocation0 [shape = 'u32[]', space=smem, size = 0x4, offset = 0x4, fixed_abs, tag = 'smem constant byte address 0x4 - core index']
  #allocation1 [shape = 'u32[144,128]{1,0:T(1,128)}', space=vmem, size = 0x12000, scoped, tag = 'internal scratch']
  %s0 = inlined_call_operand.vmem [shape: bf16[16,16], index: 0, kind: input, shape index: {}]
  %s1 = inlined_call_operand.vmem [shape: bf16[16,128], index: 1, kind: input, shape index: {}]
  %s2 = inlined_call_operand.vmem [shape: bf16[32,128], index: 2, kind: input, shape index: {}]
  %s3 = inlined_call_operand.vmem [shape: f32[1,128], index: 3, kind: input, shape index: {}]
  %s4 = inlined_call_operand.vmem [shape: bf16[32,128], index: 4, kind: input, shape index: {}]
  %s5 = inlined_call_operand.vmem [shape: bf16[32,128], index: 5, kind: input, shape index: {}]
  %s6 = inlined_call_operand.vmem [shape: f32[1,128], index: 6, kind: input, shape index: {}]
  %s7 = inlined_call_operand.vmem [shape: bf16[32,128], index: 7, kind: input, shape index: {}]
  %s8 = inlined_call_operand.vmem [shape: f32[1,128], index: 8, kind: input, shape index: {}]
  %s9 = inlined_call_operand.vmem [shape: f32[16,128], index: 9, kind: output, shape index: {}]
  %s10 = sld [smem:[#allocation0]]
  $region46: #{lstmwrapper2_forward.1} parent=0
    _
  %s12 = ssub.s32 1, %s10
  %s13 = scalar_select 0, %s12, %s10
  // Predicated region
  $region2: #{lstmwrapper2_forward.1} parent=0 // pred_check
    _
  $region3: #{lstmwrapper2_forward.1} parent=0 // pred_check_branch
    %15 = sbr.rel (0) target = $region5
  $region4: #{lstmwrapper2_forward.1} parent=0 // pred_region
    _
  $region5: #{lstmwrapper2_forward.1} parent=0 // pred_fallthru
    _
  // Predicated region
  $region6: #{lstmwrapper2_forward.1} parent=0 // pred_check
    _
  $region7: #{lstmwrapper2_forward.1} parent=0 // pred_check_branch
    %17 = sbr.rel (0) target = $region9
  $region8: #{lstmwrapper2_forward.1} parent=0 // pred_region
    _
  $region9: #{lstmwrapper2_forward.1} parent=0 // pred_fallthru
    _
  // Predicated region
  $region10: #{lstmwrapper2_forward.1} parent=0 // pred_check
    _
  $region11: #{lstmwrapper2_forward.1} parent=0 // pred_check_branch
    %19 = sbr.rel (0) target = $region13
  $region12: #{lstmwrapper2_forward.1} parent=0 // pred_region
    _
  $region13: #{lstmwrapper2_forward.1} parent=0 // pred_fallthru
    _
  // Predicated region
  $region14: #{lstmwrapper2_forward.1} parent=0 // pred_check
    _
  $region15: #{lstmwrapper2_forward.1} parent=0 // pred_check_branch
    %21 = sbr.rel (0) target = $region17
  $region16: #{lstmwrapper2_forward.1} parent=0 // pred_region
    _
  $region17: #{lstmwrapper2_forward.1} parent=0 // pred_fallthru
    _
  // Predicated region
  $region18: #{lstmwrapper2_forward.1} parent=0 // pred_check
    _
  $region19: #{lstmwrapper2_forward.1} parent=0 // pred_check_branch
    %23 = sbr.rel (0) target = $region21
  $region20: #{lstmwrapper2_forward.1} parent=0 // pred_region
    _
  $region21: #{lstmwrapper2_forward.1} parent=0 // pred_fallthru
    _
  // Predicated region
  $region22: #{lstmwrapper2_forward.1} parent=0 // pred_check
    _
  $region23: #{lstmwrapper2_forward.1} parent=0 // pred_check_branch
    %25 = sbr.rel (0) target = $region25
  $region24: #{lstmwrapper2_forward.1} parent=0 // pred_region
    _
  $region25: #{lstmwrapper2_forward.1} parent=0 // pred_fallthru
    _
  // Predicated region
  $region26: #{lstmwrapper2_forward.1} parent=0 // pred_check
    _
  $region27: #{lstmwrapper2_forward.1} parent=0 // pred_check_branch
    %27 = sbr.rel (0) target = $region29
  $region28: #{lstmwrapper2_forward.1} parent=0 // pred_region
    _
  $region29: #{lstmwrapper2_forward.1} parent=0 // pred_fallthru
    _
  // Predicated region
  $region30: #{lstmwrapper2_forward.1} parent=0 // pred_check
    _
  $region31: #{lstmwrapper2_forward.1} parent=0 // pred_check_branch
    %29 = sbr.rel (0) target = $region33
  $region32: #{lstmwrapper2_forward.1} parent=0 // pred_region
    _
  $region33: #{lstmwrapper2_forward.1} parent=0 // pred_fallthru
    _
  // Predicated region
  $region34: #{lstmwrapper2_forward.1} parent=0 // pred_check
    _
  $region35: #{lstmwrapper2_forward.1} parent=0 // pred_check_branch
    %31 = sbr.rel (0) target = $region37
  $region36: #{lstmwrapper2_forward.1} parent=0 // pred_region
    _
  $region37: #{lstmwrapper2_forward.1} parent=0 // pred_fallthru
    _
  %v33 = vld [vmem:[%s1] sm:$0xf]
  %v34 = vld [vmem:[%s1 + $0x4] sm:$0xf]
  %v35 = vld [vmem:[%s4] sm:$0xf]
  %v36 = vld [vmem:[%s4 + $0x4] sm:$0xf]
  %v37 = vld [vmem:[%s4 + $0x8] sm:$0xf]
  %v38 = vld [vmem:[%s4 + $0xc] sm:$0xf]
  %v39 = vld [vmem:[%s2] sm:$0xf]
  %v40 = vld [vmem:[%s2 + $0x4] sm:$0xf]
  %v41 = vld [vmem:[%s2 + $0x8] sm:$0xf]
  %v42 = vld [vmem:[%s2 + $0xc] sm:$0xf]
  %v43 = vld [vmem:[%s5] sm:$0xf]
  %v44 = vld [vmem:[%s5 + $0x4] sm:$0xf]
  %v45 = vld [vmem:[%s5 + $0x8] sm:$0xf]
  %v46 = vld [vmem:[%s5 + $0xc] sm:$0xf]
  %v47 = vld [vmem:[%s3] sm:$0x1]
  %v48 = vld [vmem:[%s6] sm:$0x1]
  %v49 = vld [vmem:[%s0] sm:$0xf]
  %v50 = vld [vmem:[%s0 + $0x4] sm:$0xf]
  %v52 = vlaneseq
  %v53 = vshrl.u32 %v52, 7
  %v54 = vsub.s32 0, %v53
  %v55 = vrot.slane %v47, %v54
  %v59 = vunpack.c.l.b16 %v49
  %v60 = vunpack.c.l.b16 %v50
  %v61 = vpack.c.b16 %v60, %v59
  %v64 = vunpack.c.l.b16 %v33
  %v65 = vunpack.c.l.b16 %v34
  %v66 = vpack.c.b16 %v65, %v64
  %vm68 = vcmask 130048
  %v70 = vsel %vm68, %v61, 0
  %72 = vmatprep.subr.bf16.mxu0 0
  %73 = vmatpush1.bf16.msra.mxu0 %v66
  %74 = vmatprep.subr.bf16.mxu0 0
  %75 = vmatpush1.bf16.msra.mxu0 0
  %76 = vmatprep.subr.bf16.mxu0 0
  %77 = vmatpush1.bf16.msra.mxu0 0
  %78 = vmatprep.subr.bf16.mxu0 0
  %79 = vmatpush1.bf16.msra.mxu0 0
  %80 = vmatprep.subr.bf16.mxu0 0
  %81 = vmatpush1.bf16.msra.mxu0 0
  %82 = vmatprep.subr.bf16.mxu0 0
  %83 = vmatpush1.bf16.msra.mxu0 0
  %84 = vmatprep.subr.bf16.mxu0 0
  %85 = vmatpush1.bf16.msra.mxu0 0
  %86 = vmatprep.subr.bf16.mxu0 0
  %87 = vmatpush1.bf16.msra.mxu0 0
  %88 = vmatprep.subr.bf16.mxu0 0
  %89 = vmatpush1.bf16.msra.mxu0 0
  %90 = vmatprep.subr.bf16.mxu0 0
  %91 = vmatpush1.bf16.msra.mxu0 0
  %92 = vmatprep.subr.bf16.mxu0 0
  %93 = vmatpush1.bf16.msra.mxu0 0
  %94 = vmatprep.subr.bf16.mxu0 0
  %95 = vmatpush1.bf16.msra.mxu0 0
  %96 = vmatprep.subr.bf16.mxu0 0
  %97 = vmatpush1.bf16.msra.mxu0 0
  %98 = vmatprep.subr.bf16.mxu0 0
  %99 = vmatpush1.bf16.msra.mxu0 0
  %100 = vmatprep.subr.bf16.mxu0 0
  %101 = vmatpush1.bf16.msra.mxu0 0
  %102 = vmatprep.subr.bf16.mxu0 0
  %103 = vmatpush1.bf16.msra.mxu0 0
  %104 = vmatprep.mubr.bf16.mxu0 0
  %105 = vmatmul.mubr.bf16.gmra.mrb[0].mxu0 %v70
  %v106 = vpop.f32.mrb[0].mxu0
  %v107 = vadd.f32 %v55, %v106
  %v108 = vpop.f32.mrb[0].mxu0
  %v109 = vpop.f32.mrb[0].mxu0
  %v110 = vadd.f32 %v55, %v109
  %v111 = vpop.f32.mrb[0].mxu0
  %112 = vdwg.mxu0
  %v117 = vunpack.c.l.b16 %v39
  %v118 = vunpack.c.l.b16 %v40
  %v119 = vunpack.c.l.b16 %v41
  %v120 = vunpack.c.l.b16 %v42
  %v121 = vpack.c.b16 %v118, %v117
  %v122 = vpack.c.b16 %v120, %v119
  %vm125 = vcmask 261120
  %v127 = vsel %vm125, 0, 0
  %129 = vmatprep.subr.bf16.mxu0 0
  %130 = vmatpush1.bf16.msra.mxu0 %v121
  %131 = vmatprep.subr.bf16.mxu0 0
  %132 = vmatpush1.bf16.msra.mxu0 %v122
  %133 = vmatprep.subr.bf16.mxu0 0
  %134 = vmatpush1.bf16.msra.mxu0 0
  %135 = vmatprep.subr.bf16.mxu0 0
  %136 = vmatpush1.bf16.msra.mxu0 0
  %137 = vmatprep.subr.bf16.mxu0 0
  %138 = vmatpush1.bf16.msra.mxu0 0
  %139 = vmatprep.subr.bf16.mxu0 0
  %140 = vmatpush1.bf16.msra.mxu0 0
  %141 = vmatprep.subr.bf16.mxu0 0
  %142 = vmatpush1.bf16.msra.mxu0 0
  %143 = vmatprep.subr.bf16.mxu0 0
  %144 = vmatpush1.bf16.msra.mxu0 0
  %145 = vmatprep.subr.bf16.mxu0 0
  %146 = vmatpush1.bf16.msra.mxu0 0
  %147 = vmatprep.subr.bf16.mxu0 0
  %148 = vmatpush1.bf16.msra.mxu0 0
  %149 = vmatprep.subr.bf16.mxu0 0
  %150 = vmatpush1.bf16.msra.mxu0 0
  %151 = vmatprep.subr.bf16.mxu0 0
  %152 = vmatpush1.bf16.msra.mxu0 0
  %153 = vmatprep.subr.bf16.mxu0 0
  %154 = vmatpush1.bf16.msra.mxu0 0
  %155 = vmatprep.subr.bf16.mxu0 0
  %156 = vmatpush1.bf16.msra.mxu0 0
  %157 = vmatprep.subr.bf16.mxu0 0
  %158 = vmatpush1.bf16.msra.mxu0 0
  %159 = vmatprep.subr.bf16.mxu0 0
  %160 = vmatpush1.bf16.msra.mxu0 0
  %161 = vmatprep.mubr.bf16.mxu0 0
  %162 = vmatmul.mubr.bf16.gmra.mrb[0].mxu0 %v127
  %v163 = vpop.f32.mrb[0].mxu0
  %v164 = vadd.f32 0.0, %v163
  %v165 = vpop.f32.mrb[0].mxu0
  %v166 = vpop.f32.mrb[0].mxu0
  %v167 = vpop.f32.mrb[0].mxu0
  %168 = vdwg.mxu0
  %v169 = vadd.f32 %v107, %v164
  %v170 = vxor.u32 %v169, 2147483648
  %v171 = vmul.f32 %v170, 1.442695
  %v172 = vpow.pop %v171
  %v173 = vadd.f32 %v172, 1.0
  %v174 = vrcp.pop %v173
  %v175 = vmul.f32 1.0, %v174
  %v176 = vtanh.pop %v169
  %v177 = vmul.f32 %v175, 0.0
  %179 = vrot.lane.b32.xlu0 %v176, 64
  %v180 = vpop.permute.xlu0 %179
  %v182 = vmul.f32 %v175, %v180
  %184 = vrot.lane.b32.xlu0 %v182, 32
  %v185 = vpop.permute.xlu0 %184
  %v187 = vadd.f32 %v177, %v185
  %v188 = vtanh.pop %v187
  %190 = vrot.lane.b32.xlu0 %v188, 64
  %v191 = vpop.permute.xlu0 %190
  %v193 = vmul.f32 %v175, %v191
  %v194 = vpack.c.bf16 %v193, %v193
  %v199 = vunpack.c.l.b16 %v43
  %v200 = vunpack.c.l.b16 %v44
  %v201 = vunpack.c.l.b16 %v45
  %v202 = vunpack.c.l.b16 %v46
  %v203 = vpack.c.b16 %v200, %v199
  %v204 = vpack.c.b16 %v202, %v201
  %207 = vmatprep.subr.bf16.mxu0 0
  %208 = vmatpush1.bf16.msra.mxu0 %v203
  %209 = vmatprep.subr.bf16.mxu0 0
  %210 = vmatpush1.bf16.msra.mxu0 %v204
  %211 = vmatprep.subr.bf16.mxu0 0
  %212 = vmatpush1.bf16.msra.mxu0 0
  %213 = vmatprep.subr.bf16.mxu0 0
  %214 = vmatpush1.bf16.msra.mxu0 0
  %215 = vmatprep.subr.bf16.mxu0 0
  %216 = vmatpush1.bf16.msra.mxu0 0
  %217 = vmatprep.subr.bf16.mxu0 0
  %218 = vmatpush1.bf16.msra.mxu0 0
  %219 = vmatprep.subr.bf16.mxu0 0
  %220 = vmatpush1.bf16.msra.mxu0 0
  %221 = vmatprep.subr.bf16.mxu0 0
  %222 = vmatpush1.bf16.msra.mxu0 0
  %223 = vmatprep.subr.bf16.mxu0 0
  %224 = vmatpush1.bf16.msra.mxu0 0
  %225 = vmatprep.subr.bf16.mxu0 0
  %226 = vmatpush1.bf16.msra.mxu0 0
  %227 = vmatprep.subr.bf16.mxu0 0
  %228 = vmatpush1.bf16.msra.mxu0 0
  %229 = vmatprep.subr.bf16.mxu0 0
  %230 = vmatpush1.bf16.msra.mxu0 0
  %231 = vmatprep.subr.bf16.mxu0 0
  %232 = vmatpush1.bf16.msra.mxu0 0
  %233 = vmatprep.subr.bf16.mxu0 0
  %234 = vmatpush1.bf16.msra.mxu0 0
  %235 = vmatprep.subr.bf16.mxu0 0
  %236 = vmatpush1.bf16.msra.mxu0 0
  %237 = vmatprep.subr.bf16.mxu0 0
  %238 = vmatpush1.bf16.msra.mxu0 0
  %239 = vmatprep.mubr.bf16.mxu0 0
  %240 = vmatmul.mubr.bf16.gmra.mrb[0].mxu0 %v127
  %v241 = vpop.f32.mrb[0].mxu0
  %v242 = vadd.f32 0.0, %v241
  %v243 = vpop.f32.mrb[0].mxu0
  %v244 = vpop.f32.mrb[0].mxu0
  %v245 = vpop.f32.mrb[0].mxu0
  %246 = vdwg.mxu0
  %248 = vrot.lane.b32.xlu0 %v194, 32
  %v249 = vpop.permute.xlu0 %248
  %v254 = vunpack.c.l.b16 %v35
  %v255 = vunpack.c.l.b16 %v36
  %v256 = vunpack.c.l.b16 %v37
  %v257 = vunpack.c.l.b16 %v38
  %v258 = vpack.c.b16 %v255, %v254
  %v259 = vpack.c.b16 %v257, %v256
  %v263 = vsel %vm125, %v249, 0
  %265 = vmatprep.subr.bf16.mxu0 0
  %266 = vmatpush1.bf16.msra.mxu0 %v258
  %267 = vmatprep.subr.bf16.mxu0 0
  %268 = vmatpush1.bf16.msra.mxu0 %v259
  %269 = vmatprep.subr.bf16.mxu0 0
  %270 = vmatpush1.bf16.msra.mxu0 0
  %271 = vmatprep.subr.bf16.mxu0 0
  %272 = vmatpush1.bf16.msra.mxu0 0
  %273 = vmatprep.subr.bf16.mxu0 0
  %274 = vmatpush1.bf16.msra.mxu0 0
  %275 = vmatprep.subr.bf16.mxu0 0
  %276 = vmatpush1.bf16.msra.mxu0 0
  %277 = vmatprep.subr.bf16.mxu0 0
  %278 = vmatpush1.bf16.msra.mxu0 0
  %279 = vmatprep.subr.bf16.mxu0 0
  %280 = vmatpush1.bf16.msra.mxu0 0
  %281 = vmatprep.subr.bf16.mxu0 0
  %282 = vmatpush1.bf16.msra.mxu0 0
  %283 = vmatprep.subr.bf16.mxu0 0
  %284 = vmatpush1.bf16.msra.mxu0 0
  %285 = vmatprep.subr.bf16.mxu0 0
  %286 = vmatpush1.bf16.msra.mxu0 0
  %287 = vmatprep.subr.bf16.mxu0 0
  %288 = vmatpush1.bf16.msra.mxu0 0
  %289 = vmatprep.subr.bf16.mxu0 0
  %290 = vmatpush1.bf16.msra.mxu0 0
  %291 = vmatprep.subr.bf16.mxu0 0
  %292 = vmatpush1.bf16.msra.mxu0 0
  %293 = vmatprep.subr.bf16.mxu0 0
  %294 = vmatpush1.bf16.msra.mxu0 0
  %295 = vmatprep.subr.bf16.mxu0 0
  %296 = vmatpush1.bf16.msra.mxu0 0
  %297 = vmatprep.mubr.bf16.mxu0 0
  %298 = vmatmul.mubr.bf16.gmra.mrb[0].mxu0 %v263
  %v299 = vpop.f32.mrb[0].mxu0
  %v300 = vadd.f32 %v242, %v299
  %v301 = vpop.f32.mrb[0].mxu0
  %v302 = vpop.f32.mrb[0].mxu0
  %v303 = vpop.f32.mrb[0].mxu0
  %304 = vdwg.mxu0
  %v306 = vlaneseq
  %v307 = vshrl.u32 %v306, 7
  %v308 = vsub.s32 0, %v307
  %v309 = vrot.slane %v48, %v308
  %v311 = vadd.f32 %v300, %v309
  %v312 = vxor.u32 %v311, 2147483648
  %v313 = vmul.f32 %v312, 1.442695
  %v314 = vpow.pop %v313
  %v315 = vadd.f32 %v314, 1.0
  %v316 = vrcp.pop %v315
  %v317 = vmul.f32 1.0, %v316
  %v318 = vtanh.pop %v311
  %v319 = vmul.f32 %v317, 0.0
  %321 = vrot.lane.b32.xlu0 %v318, 64
  %v322 = vpop.permute.xlu0 %321
  %v324 = vmul.f32 %v317, %v322
  %326 = vrot.lane.b32.xlu0 %v324, 32
  %v327 = vpop.permute.xlu0 %326
  %v329 = vadd.f32 %v319, %v327
  %v330 = vtanh.pop %v329
  %332 = vrot.lane.b32.xlu0 %v330, 64
  %v333 = vpop.permute.xlu0 %332
  %v335 = vmul.f32 %v317, %v333
  %336 = vmatprep.subr.bf16.mxu0 0
  %337 = vmatpush1.bf16.msra.mxu0 %v121
  %338 = vmatprep.subr.bf16.mxu0 0
  %339 = vmatpush1.bf16.msra.mxu0 %v122
  %340 = vmatprep.subr.bf16.mxu0 0
  %341 = vmatpush1.bf16.msra.mxu0 0
  %342 = vmatprep.subr.bf16.mxu0 0
  %343 = vmatpush1.bf16.msra.mxu0 0
  %344 = vmatprep.subr.bf16.mxu0 0
  %345 = vmatpush1.bf16.msra.mxu0 0
  %346 = vmatprep.subr.bf16.mxu0 0
  %347 = vmatpush1.bf16.msra.mxu0 0
  %348 = vmatprep.subr.bf16.mxu0 0
  %349 = vmatpush1.bf16.msra.mxu0 0
  %350 = vmatprep.subr.bf16.mxu0 0
  %351 = vmatpush1.bf16.msra.mxu0 0
  %352 = vmatprep.subr.bf16.mxu0 0
  %353 = vmatpush1.bf16.msra.mxu0 0
  %354 = vmatprep.subr.bf16.mxu0 0
  %355 = vmatpush1.bf16.msra.mxu0 0
  %356 = vmatprep.subr.bf16.mxu0 0
  %357 = vmatpush1.bf16.msra.mxu0 0
  %358 = vmatprep.subr.bf16.mxu0 0
  %359 = vmatpush1.bf16.msra.mxu0 0
  %360 = vmatprep.subr.bf16.mxu0 0
  %361 = vmatpush1.bf16.msra.mxu0 0
  %362 = vmatprep.subr.bf16.mxu0 0
  %363 = vmatpush1.bf16.msra.mxu0 0
  %364 = vmatprep.subr.bf16.mxu0 0
  %365 = vmatpush1.bf16.msra.mxu0 0
  %366 = vmatprep.subr.bf16.mxu0 0
  %367 = vmatpush1.bf16.msra.mxu0 0
  %368 = vmatprep.mubr.bf16.mxu0 0
  %369 = vmatmul.mubr.bf16.gmra.mrb[0].mxu0 %v263
  %v370 = vpop.f32.mrb[0].mxu0
  %v371 = vadd.f32 0.0, %v370
  %v372 = vpop.f32.mrb[0].mxu0
  %v373 = vpop.f32.mrb[0].mxu0
  %v374 = vpop.f32.mrb[0].mxu0
  %375 = vdwg.mxu0
  %v377 = vrot.slane %v371, 6
  %v379 = vadd.f32 %v107, %v377
  %v380 = vxor.u32 %v379, 2147483648
  %v381 = vmul.f32 %v380, 1.442695
  %v382 = vpow.pop %v381
  %v383 = vadd.f32 %v382, 1.0
  %v384 = vrcp.pop %v383
  %v385 = vmul.f32 1.0, %v384
  %v386 = vtanh.pop %v379
  %v388 = vrot.slane %v187, 6
  %v390 = vmul.f32 %v385, %v388
  %392 = vrot.lane.b32.xlu0 %v386, 64
  %v393 = vpop.permute.xlu0 %392
  %v395 = vmul.f32 %v385, %v393
  %397 = vrot.lane.b32.xlu0 %v395, 32
  %v398 = vpop.permute.xlu0 %397
  %v400 = vadd.f32 %v390, %v398
  %v401 = vtanh.pop %v400
  %403 = vrot.lane.b32.xlu0 %v401, 64
  %v404 = vpop.permute.xlu0 %403
  %v406 = vmul.f32 %v385, %v404
  %v407 = vpack.c.bf16 %v406, %v406
  %v408 = vpack.c.bf16 %v335, %v335
  %410 = vrot.lane.b32.xlu0 %v408, 32
  %v411 = vpop.permute.xlu0 %410
  %v413 = vsel %vm125, %v411, 0
  %415 = vmatprep.subr.bf16.mxu0 0
  %416 = vmatpush1.bf16.msra.mxu0 %v203
  %417 = vmatprep.subr.bf16.mxu0 0
  %418 = vmatpush1.bf16.msra.mxu0 %v204
  %419 = vmatprep.subr.bf16.mxu0 0
  %420 = vmatpush1.bf16.msra.mxu0 0
  %421 = vmatprep.subr.bf16.mxu0 0
  %422 = vmatpush1.bf16.msra.mxu0 0
  %423 = vmatprep.subr.bf16.mxu0 0
  %424 = vmatpush1.bf16.msra.mxu0 0
  %425 = vmatprep.subr.bf16.mxu0 0
  %426 = vmatpush1.bf16.msra.mxu0 0
  %427 = vmatprep.subr.bf16.mxu0 0
  %428 = vmatpush1.bf16.msra.mxu0 0
  %429 = vmatprep.subr.bf16.mxu0 0
  %430 = vmatpush1.bf16.msra.mxu0 0
  %431 = vmatprep.subr.bf16.mxu0 0
  %432 = vmatpush1.bf16.msra.mxu0 0
  %433 = vmatprep.subr.bf16.mxu0 0
  %434 = vmatpush1.bf16.msra.mxu0 0
  %435 = vmatprep.subr.bf16.mxu0 0
  %436 = vmatpush1.bf16.msra.mxu0 0
  %437 = vmatprep.subr.bf16.mxu0 0
  %438 = vmatpush1.bf16.msra.mxu0 0
  %439 = vmatprep.subr.bf16.mxu0 0
  %440 = vmatpush1.bf16.msra.mxu0 0
  %441 = vmatprep.subr.bf16.mxu0 0
  %442 = vmatpush1.bf16.msra.mxu0 0
  %443 = vmatprep.subr.bf16.mxu0 0
  %444 = vmatpush1.bf16.msra.mxu0 0
  %445 = vmatprep.subr.bf16.mxu0 0
  %446 = vmatpush1.bf16.msra.mxu0 0
  %447 = vmatprep.mubr.bf16.mxu0 0
  %448 = vmatmul.mubr.bf16.gmra.mrb[0].mxu0 %v413
  %v449 = vpop.f32.mrb[0].mxu0
  %v450 = vadd.f32 0.0, %v449
  %v451 = vpop.f32.mrb[0].mxu0
  %v452 = vpop.f32.mrb[0].mxu0
  %v453 = vpop.f32.mrb[0].mxu0
  %454 = vdwg.mxu0
  %v456 = vrot.slane %v407, 1
  %457 = vrot.lane.b32.xlu0 %v456, 32
  %v458 = vpop.permute.xlu0 %457
  %v460 = vsel %vm125, %v458, 0
  %462 = vmatprep.subr.bf16.mxu0 0
  %463 = vmatpush1.bf16.msra.mxu0 %v258
  %464 = vmatprep.subr.bf16.mxu0 0
  %465 = vmatpush1.bf16.msra.mxu0 %v259
  %466 = vmatprep.subr.bf16.mxu0 0
  %467 = vmatpush1.bf16.msra.mxu0 0
  %468 = vmatprep.subr.bf16.mxu0 0
  %469 = vmatpush1.bf16.msra.mxu0 0
  %470 = vmatprep.subr.bf16.mxu0 0
  %471 = vmatpush1.bf16.msra.mxu0 0
  %472 = vmatprep.subr.bf16.mxu0 0
  %473 = vmatpush1.bf16.msra.mxu0 0
  %474 = vmatprep.subr.bf16.mxu0 0
  %475 = vmatpush1.bf16.msra.mxu0 0
  %476 = vmatprep.subr.bf16.mxu0 0
  %477 = vmatpush1.bf16.msra.mxu0 0
  %478 = vmatprep.subr.bf16.mxu0 0
  %479 = vmatpush1.bf16.msra.mxu0 0
  %480 = vmatprep.subr.bf16.mxu0 0
  %481 = vmatpush1.bf16.msra.mxu0 0
  %482 = vmatprep.subr.bf16.mxu0 0
  %483 = vmatpush1.bf16.msra.mxu0 0
  %484 = vmatprep.subr.bf16.mxu0 0
  %485 = vmatpush1.bf16.msra.mxu0 0
  %486 = vmatprep.subr.bf16.mxu0 0
  %487 = vmatpush1.bf16.msra.mxu0 0
  %488 = vmatprep.subr.bf16.mxu0 0
  %489 = vmatpush1.bf16.msra.mxu0 0
  %490 = vmatprep.subr.bf16.mxu0 0
  %491 = vmatpush1.bf16.msra.mxu0 0
  %492 = vmatprep.subr.bf16.mxu0 0
  %493 = vmatpush1.bf16.msra.mxu0 0
  %494 = vmatprep.mubr.bf16.mxu0 0
  %495 = vmatmul.mubr.bf16.gmra.mrb[0].mxu0 %v460
  %v496 = vpop.f32.mrb[0].mxu0
  %v497 = vadd.f32 %v450, %v496
  %v498 = vpop.f32.mrb[0].mxu0
  %v499 = vpop.f32.mrb[0].mxu0
  %v500 = vpop.f32.mrb[0].mxu0
  %501 = vdwg.mxu0
  %v502 = vadd.f32 %v497, %v309
  %v503 = vxor.u32 %v502, 2147483648
  %v504 = vmul.f32 %v503, 1.442695
  %v505 = vpow.pop %v504
  %v506 = vadd.f32 %v505, 1.0
  %v507 = vrcp.pop %v506
  %v508 = vmul.f32 1.0, %v507
  %v509 = vtanh.pop %v502
  %v510 = vmul.f32 %v508, %v329
  %512 = vrot.lane.b32.xlu0 %v509, 64
  %v513 = vpop.permute.xlu0 %512
  %v515 = vmul.f32 %v508, %v513
  %517 = vrot.lane.b32.xlu0 %v515, 32
  %v518 = vpop.permute.xlu0 %517
  %v520 = vadd.f32 %v510, %v518
  %v521 = vtanh.pop %v520
  %523 = vrot.lane.b32.xlu0 %v521, 64
  %v524 = vpop.permute.xlu0 %523
  %v526 = vmul.f32 %v508, %v524
  %527 = vmatprep.subr.bf16.mxu0 0
  %528 = vmatpush1.bf16.msra.mxu0 %v121
  %529 = vmatprep.subr.bf16.mxu0 0
  %530 = vmatpush1.bf16.msra.mxu0 %v122
  %531 = vmatprep.subr.bf16.mxu0 0
  %532 = vmatpush1.bf16.msra.mxu0 0
  %533 = vmatprep.subr.bf16.mxu0 0
  %534 = vmatpush1.bf16.msra.mxu0 0
  %535 = vmatprep.subr.bf16.mxu0 0
  %536 = vmatpush1.bf16.msra.mxu0 0
  %537 = vmatprep.subr.bf16.mxu0 0
  %538 = vmatpush1.bf16.msra.mxu0 0
  %539 = vmatprep.subr.bf16.mxu0 0
  %540 = vmatpush1.bf16.msra.mxu0 0
  %541 = vmatprep.subr.bf16.mxu0 0
  %542 = vmatpush1.bf16.msra.mxu0 0
  %543 = vmatprep.subr.bf16.mxu0 0
  %544 = vmatpush1.bf16.msra.mxu0 0
  %545 = vmatprep.subr.bf16.mxu0 0
  %546 = vmatpush1.bf16.msra.mxu0 0
  %547 = vmatprep.subr.bf16.mxu0 0
  %548 = vmatpush1.bf16.msra.mxu0 0
  %549 = vmatprep.subr.bf16.mxu0 0
  %550 = vmatpush1.bf16.msra.mxu0 0
  %551 = vmatprep.subr.bf16.mxu0 0
  %552 = vmatpush1.bf16.msra.mxu0 0
  %553 = vmatprep.subr.bf16.mxu0 0
  %554 = vmatpush1.bf16.msra.mxu0 0
  %555 = vmatprep.subr.bf16.mxu0 0
  %556 = vmatpush1.bf16.msra.mxu0 0
  %557 = vmatprep.subr.bf16.mxu0 0
  %558 = vmatpush1.bf16.msra.mxu0 0
  %559 = vmatprep.mubr.bf16.mxu0 0
  %560 = vmatmul.mubr.bf16.gmra.mrb[0].mxu0 %v460
  %v561 = vpop.f32.mrb[0].mxu0
  %v562 = vadd.f32 0.0, %v561
  %v563 = vpop.f32.mrb[0].mxu0
  %v564 = vpop.f32.mrb[0].mxu0
  %v565 = vpop.f32.mrb[0].mxu0
  %566 = vdwg.mxu0
  %v568 = vrot.slane %v562, 4
  %v570 = vadd.f32 %v107, %v568
  %v571 = vxor.u32 %v570, 2147483648
  %v572 = vmul.f32 %v571, 1.442695
  %v573 = vpow.pop %v572
  %v574 = vadd.f32 %v573, 1.0
  %v575 = vrcp.pop %v574
  %v576 = vmul.f32 1.0, %v575
  %v577 = vtanh.pop %v570
  %v579 = vrot.slane %v400, 6
  %v581 = vmul.f32 %v576, %v579
  %583 = vrot.lane.b32.xlu0 %v577, 64
  %v584 = vpop.permute.xlu0 %583
  %v586 = vmul.f32 %v576, %v584
  %588 = vrot.lane.b32.xlu0 %v586, 32
  %v589 = vpop.permute.xlu0 %588
  %v591 = vadd.f32 %v581, %v589
  %v592 = vtanh.pop %v591
  %594 = vrot.lane.b32.xlu0 %v592, 64
  %v595 = vpop.permute.xlu0 %594
  %v597 = vmul.f32 %v576, %v595
  %v598 = vpack.c.bf16 %v597, %v597
  %v599 = vpack.c.bf16 %v526, %v526
  %601 = vrot.lane.b32.xlu0 %v599, 32
  %v602 = vpop.permute.xlu0 %601
  %v604 = vsel %vm125, %v602, 0
  %606 = vmatprep.subr.bf16.mxu0 0
  %607 = vmatpush1.bf16.msra.mxu0 %v203
  %608 = vmatprep.subr.bf16.mxu0 0
  %609 = vmatpush1.bf16.msra.mxu0 %v204
  %610 = vmatprep.subr.bf16.mxu0 0
  %611 = vmatpush1.bf16.msra.mxu0 0
  %612 = vmatprep.subr.bf16.mxu0 0
  %613 = vmatpush1.bf16.msra.mxu0 0
  %614 = vmatprep.subr.bf16.mxu0 0
  %615 = vmatpush1.bf16.msra.mxu0 0
  %616 = vmatprep.subr.bf16.mxu0 0
  %617 = vmatpush1.bf16.msra.mxu0 0
  %618 = vmatprep.subr.bf16.mxu0 0
  %619 = vmatpush1.bf16.msra.mxu0 0
  %620 = vmatprep.subr.bf16.mxu0 0
  %621 = vmatpush1.bf16.msra.mxu0 0
  %622 = vmatprep.subr.bf16.mxu0 0
  %623 = vmatpush1.bf16.msra.mxu0 0
  %624 = vmatprep.subr.bf16.mxu0 0
  %625 = vmatpush1.bf16.msra.mxu0 0
  %626 = vmatprep.subr.bf16.mxu0 0
  %627 = vmatpush1.bf16.msra.mxu0 0
  %628 = vmatprep.subr.bf16.mxu0 0
  %629 = vmatpush1.bf16.msra.mxu0 0
  %630 = vmatprep.subr.bf16.mxu0 0
  %631 = vmatpush1.bf16.msra.mxu0 0
  %632 = vmatprep.subr.bf16.mxu0 0
  %633 = vmatpush1.bf16.msra.mxu0 0
  %634 = vmatprep.subr.bf16.mxu0 0
  %635 = vmatpush1.bf16.msra.mxu0 0
  %636 = vmatprep.subr.bf16.mxu0 0
  %637 = vmatpush1.bf16.msra.mxu0 0
  %638 = vmatprep.mubr.bf16.mxu0 0
  %639 = vmatmul.mubr.bf16.gmra.mrb[0].mxu0 %v604
  %v640 = vpop.f32.mrb[0].mxu0
  %v641 = vadd.f32 0.0, %v640
  %v642 = vpop.f32.mrb[0].mxu0
  %v643 = vpop.f32.mrb[0].mxu0
  %v644 = vpop.f32.mrb[0].mxu0
  %645 = vdwg.mxu0
  %v647 = vrot.slane %v598, 2
  %648 = vrot.lane.b32.xlu0 %v647, 32
  %v649 = vpop.permute.xlu0 %648
  %v651 = vsel %vm125, %v649, 0
  %653 = vmatprep.subr.bf16.mxu0 0
  %654 = vmatpush1.bf16.msra.mxu0 %v258
  %655 = vmatprep.subr.bf16.mxu0 0
  %656 = vmatpush1.bf16.msra.mxu0 %v259
  %657 = vmatprep.subr.bf16.mxu0 0
  %658 = vmatpush1.bf16.msra.mxu0 0
  %659 = vmatprep.subr.bf16.mxu0 0
  %660 = vmatpush1.bf16.msra.mxu0 0
  %661 = vmatprep.subr.bf16.mxu0 0
  %662 = vmatpush1.bf16.msra.mxu0 0
  %663 = vmatprep.subr.bf16.mxu0 0
  %664 = vmatpush1.bf16.msra.mxu0 0
  %665 = vmatprep.subr.bf16.mxu0 0
  %666 = vmatpush1.bf16.msra.mxu0 0
  %667 = vmatprep.subr.bf16.mxu0 0
  %668 = vmatpush1.bf16.msra.mxu0 0
  %669 = vmatprep.subr.bf16.mxu0 0
  %670 = vmatpush1.bf16.msra.mxu0 0
  %671 = vmatprep.subr.bf16.mxu0 0
  %672 = vmatpush1.bf16.msra.mxu0 0
  %673 = vmatprep.subr.bf16.mxu0 0
  %674 = vmatpush1.bf16.msra.mxu0 0
  %675 = vmatprep.subr.bf16.mxu0 0
  %676 = vmatpush1.bf16.msra.mxu0 0
  %677 = vmatprep.subr.bf16.mxu0 0
  %678 = vmatpush1.bf16.msra.mxu0 0
  %679 = vmatprep.subr.bf16.mxu0 0
  %680 = vmatpush1.bf16.msra.mxu0 0
  %681 = vmatprep.subr.bf16.mxu0 0
  %682 = vmatpush1.bf16.msra.mxu0 0
  %683 = vmatprep.subr.bf16.mxu0 0
  %684 = vmatpush1.bf16.msra.mxu0 0
  %685 = vmatprep.mubr.bf16.mxu0 0
  %686 = vmatmul.mubr.bf16.gmra.mrb[0].mxu0 %v651
  %v687 = vpop.f32.mrb[0].mxu0
  %v688 = vadd.f32 %v641, %v687
  %v689 = vpop.f32.mrb[0].mxu0
  %v690 = vpop.f32.mrb[0].mxu0
  %v691 = vpop.f32.mrb[0].mxu0
  %692 = vdwg.mxu0
  %v693 = vadd.f32 %v688, %v309
  %v694 = vxor.u32 %v693, 2147483648
  %v695 = vmul.f32 %v694, 1.442695
  %v696 = vpow.pop %v695
  %v697 = vadd.f32 %v696, 1.0
  %v698 = vrcp.pop %v697
  %v699 = vmul.f32 1.0, %v698
  %v700 = vtanh.pop %v693
  %v701 = vmul.f32 %v699, %v520
  %703 = vrot.lane.b32.xlu0 %v700, 64
  %v704 = vpop.permute.xlu0 %703
  %v706 = vmul.f32 %v699, %v704
  %708 = vrot.lane.b32.xlu0 %v706, 32
  %v709 = vpop.permute.xlu0 %708
  %v711 = vadd.f32 %v701, %v709
  %v712 = vtanh.pop %v711
  %714 = vrot.lane.b32.xlu0 %v712, 64
  %v715 = vpop.permute.xlu0 %714
  %v717 = vmul.f32 %v699, %v715
  %718 = vmatprep.subr.bf16.mxu0 0
  %719 = vmatpush1.bf16.msra.mxu0 %v121
  %720 = vmatprep.subr.bf16.mxu0 0
  %721 = vmatpush1.bf16.msra.mxu0 %v122
  %722 = vmatprep.subr.bf16.mxu0 0
  %723 = vmatpush1.bf16.msra.mxu0 0
  %724 = vmatprep.subr.bf16.mxu0 0
  %725 = vmatpush1.bf16.msra.mxu0 0
  %726 = vmatprep.subr.bf16.mxu0 0
  %727 = vmatpush1.bf16.msra.mxu0 0
  %728 = vmatprep.subr.bf16.mxu0 0
  %729 = vmatpush1.bf16.msra.mxu0 0
  %730 = vmatprep.subr.bf16.mxu0 0
  %731 = vmatpush1.bf16.msra.mxu0 0
  %732 = vmatprep.subr.bf16.mxu0 0
  %733 = vmatpush1.bf16.msra.mxu0 0
  %734 = vmatprep.subr.bf16.mxu0 0
  %735 = vmatpush1.bf16.msra.mxu0 0
  %736 = vmatprep.subr.bf16.mxu0 0
  %737 = vmatpush1.bf16.msra.mxu0 0
  %738 = vmatprep.subr.bf16.mxu0 0
  %739 = vmatpush1.bf16.msra.mxu0 0
  %740 = vmatprep.subr.bf16.mxu0 0
  %741 = vmatpush1.bf16.msra.mxu0 0
  %742 = vmatprep.subr.bf16.mxu0 0
  %743 = vmatpush1.bf16.msra.mxu0 0
  %744 = vmatprep.subr.bf16.mxu0 0
  %745 = vmatpush1.bf16.msra.mxu0 0
  %746 = vmatprep.subr.bf16.mxu0 0
  %747 = vmatpush1.bf16.msra.mxu0 0
  %748 = vmatprep.subr.bf16.mxu0 0
  %749 = vmatpush1.bf16.msra.mxu0 0
  %750 = vmatprep.mubr.bf16.mxu0 0
  %751 = vmatmul.mubr.bf16.gmra.mrb[0].mxu0 %v651
  %v752 = vpop.f32.mrb[0].mxu0
  %v753 = vadd.f32 0.0, %v752
  %v754 = vpop.f32.mrb[0].mxu0
  %v755 = vpop.f32.mrb[0].mxu0
  %v756 = vpop.f32.mrb[0].mxu0
  %757 = vdwg.mxu0
  %v759 = vrot.slane %v753, 2
  %v761 = vadd.f32 %v107, %v759
  %v762 = vxor.u32 %v761, 2147483648
  %v763 = vmul.f32 %v762, 1.442695
  %v764 = vpow.pop %v763
  %v765 = vadd.f32 %v764, 1.0
  %v766 = vrcp.pop %v765
  %v767 = vmul.f32 1.0, %v766
  %v768 = vtanh.pop %v761
  %v770 = vrot.slane %v591, 6
  %v772 = vmul.f32 %v767, %v770
  %774 = vrot.lane.b32.xlu0 %v768, 64
  %v775 = vpop.permute.xlu0 %774
  %v777 = vmul.f32 %v767, %v775
  %779 = vrot.lane.b32.xlu0 %v777, 32
  %v780 = vpop.permute.xlu0 %779
  %v782 = vadd.f32 %v772, %v780
  %v783 = vtanh.pop %v782
  %785 = vrot.lane.b32.xlu0 %v783, 64
  %v786 = vpop.permute.xlu0 %785
  %v788 = vmul.f32 %v767, %v786
  %v789 = vpack.c.bf16 %v788, %v788
  %v790 = vpack.c.bf16 %v717, %v717
  %792 = vrot.lane.b32.xlu0 %v790, 32
  %v793 = vpop.permute.xlu0 %792
  %v795 = vsel %vm125, %v793, 0
  %797 = vmatprep.subr.bf16.mxu0 0
  %798 = vmatpush1.bf16.msra.mxu0 %v203
  %799 = vmatprep.subr.bf16.mxu0 0
  %800 = vmatpush1.bf16.msra.mxu0 %v204
  %801 = vmatprep.subr.bf16.mxu0 0
  %802 = vmatpush1.bf16.msra.mxu0 0
  %803 = vmatprep.subr.bf16.mxu0 0
  %804 = vmatpush1.bf16.msra.mxu0 0
  %805 = vmatprep.subr.bf16.mxu0 0
  %806 = vmatpush1.bf16.msra.mxu0 0
  %807 = vmatprep.subr.bf16.mxu0 0
  %808 = vmatpush1.bf16.msra.mxu0 0
  %809 = vmatprep.subr.bf16.mxu0 0
  %810 = vmatpush1.bf16.msra.mxu0 0
  %811 = vmatprep.subr.bf16.mxu0 0
  %812 = vmatpush1.bf16.msra.mxu0 0
  %813 = vmatprep.subr.bf16.mxu0 0
  %814 = vmatpush1.bf16.msra.mxu0 0
  %815 = vmatprep.subr.bf16.mxu0 0
  %816 = vmatpush1.bf16.msra.mxu0 0
  %817 = vmatprep.subr.bf16.mxu0 0
  %818 = vmatpush1.bf16.msra.mxu0 0
  %819 = vmatprep.subr.bf16.mxu0 0
  %820 = vmatpush1.bf16.msra.mxu0 0
  %821 = vmatprep.subr.bf16.mxu0 0
  %822 = vmatpush1.bf16.msra.mxu0 0
  %823 = vmatprep.subr.bf16.mxu0 0
  %824 = vmatpush1.bf16.msra.mxu0 0
  %825 = vmatprep.subr.bf16.mxu0 0
  %826 = vmatpush1.bf16.msra.mxu0 0
  %827 = vmatprep.subr.bf16.mxu0 0
  %828 = vmatpush1.bf16.msra.mxu0 0
  %829 = vmatprep.mubr.bf16.mxu0 0
  %830 = vmatmul.mubr.bf16.gmra.mrb[0].mxu0 %v795
  %v831 = vpop.f32.mrb[0].mxu0
  %v832 = vadd.f32 0.0, %v831
  %v833 = vpop.f32.mrb[0].mxu0
  %v834 = vpop.f32.mrb[0].mxu0
  %v835 = vpop.f32.mrb[0].mxu0
  %836 = vdwg.mxu0
  %v838 = vrot.slane %v789, 3
  %839 = vrot.lane.b32.xlu0 %v838, 32
  %v840 = vpop.permute.xlu0 %839
  %v842 = vsel %vm125, %v840, 0
  %844 = vmatprep.subr.bf16.mxu0 0
  %845 = vmatpush1.bf16.msra.mxu0 %v258
  %846 = vmatprep.subr.bf16.mxu0 0
  %847 = vmatpush1.bf16.msra.mxu0 %v259
  %848 = vmatprep.subr.bf16.mxu0 0
  %849 = vmatpush1.bf16.msra.mxu0 0
  %850 = vmatprep.subr.bf16.mxu0 0
  %851 = vmatpush1.bf16.msra.mxu0 0
  %852 = vmatprep.subr.bf16.mxu0 0
  %853 = vmatpush1.bf16.msra.mxu0 0
  %854 = vmatprep.subr.bf16.mxu0 0
  %855 = vmatpush1.bf16.msra.mxu0 0
  %856 = vmatprep.subr.bf16.mxu0 0
  %857 = vmatpush1.bf16.msra.mxu0 0
  %858 = vmatprep.subr.bf16.mxu0 0
  %859 = vmatpush1.bf16.msra.mxu0 0
  %860 = vmatprep.subr.bf16.mxu0 0
  %861 = vmatpush1.bf16.msra.mxu0 0
  %862 = vmatprep.subr.bf16.mxu0 0
  %863 = vmatpush1.bf16.msra.mxu0 0
  %864 = vmatprep.subr.bf16.mxu0 0
  %865 = vmatpush1.bf16.msra.mxu0 0
  %866 = vmatprep.subr.bf16.mxu0 0
  %867 = vmatpush1.bf16.msra.mxu0 0
  %868 = vmatprep.subr.bf16.mxu0 0
  %869 = vmatpush1.bf16.msra.mxu0 0
  %870 = vmatprep.subr.bf16.mxu0 0
  %871 = vmatpush1.bf16.msra.mxu0 0
  %872 = vmatprep.subr.bf16.mxu0 0
  %873 = vmatpush1.bf16.msra.mxu0 0
  %874 = vmatprep.subr.bf16.mxu0 0
  %875 = vmatpush1.bf16.msra.mxu0 0
  %876 = vmatprep.mubr.bf16.mxu0 0
  %877 = vmatmul.mubr.bf16.gmra.mrb[0].mxu0 %v842
  %v878 = vpop.f32.mrb[0].mxu0
  %v879 = vadd.f32 %v832, %v878
  %v880 = vpop.f32.mrb[0].mxu0
  %v881 = vpop.f32.mrb[0].mxu0
  %v882 = vpop.f32.mrb[0].mxu0
  %883 = vdwg.mxu0
  %v884 = vadd.f32 %v879, %v309
  %v885 = vxor.u32 %v884, 2147483648
  %v886 = vmul.f32 %v885, 1.442695
  %v887 = vpow.pop %v886
  %v888 = vadd.f32 %v887, 1.0
  %v889 = vrcp.pop %v888
  %v890 = vmul.f32 1.0, %v889
  %v891 = vtanh.pop %v884
  %v892 = vmul.f32 %v890, %v711
  %894 = vrot.lane.b32.xlu0 %v891, 64
  %v895 = vpop.permute.xlu0 %894
  %v897 = vmul.f32 %v890, %v895
  %899 = vrot.lane.b32.xlu0 %v897, 32
  %v900 = vpop.permute.xlu0 %899
  %v902 = vadd.f32 %v892, %v900
  %v903 = vtanh.pop %v902
  %905 = vrot.lane.b32.xlu0 %v903, 64
  %v906 = vpop.permute.xlu0 %905
  %v908 = vmul.f32 %v890, %v906
  %909 = vmatprep.subr.bf16.mxu0 0
  %910 = vmatpush1.bf16.msra.mxu0 %v121
  %911 = vmatprep.subr.bf16.mxu0 0
  %912 = vmatpush1.bf16.msra.mxu0 %v122
  %913 = vmatprep.subr.bf16.mxu0 0
  %914 = vmatpush1.bf16.msra.mxu0 0
  %915 = vmatprep.subr.bf16.mxu0 0
  %916 = vmatpush1.bf16.msra.mxu0 0
  %917 = vmatprep.subr.bf16.mxu0 0
  %918 = vmatpush1.bf16.msra.mxu0 0
  %919 = vmatprep.subr.bf16.mxu0 0
  %920 = vmatpush1.bf16.msra.mxu0 0
  %921 = vmatprep.subr.bf16.mxu0 0
  %922 = vmatpush1.bf16.msra.mxu0 0
  %923 = vmatprep.subr.bf16.mxu0 0
  %924 = vmatpush1.bf16.msra.mxu0 0
  %925 = vmatprep.subr.bf16.mxu0 0
  %926 = vmatpush1.bf16.msra.mxu0 0
  %927 = vmatprep.subr.bf16.mxu0 0
  %928 = vmatpush1.bf16.msra.mxu0 0
  %929 = vmatprep.subr.bf16.mxu0 0
  %930 = vmatpush1.bf16.msra.mxu0 0
  %931 = vmatprep.subr.bf16.mxu0 0
  %932 = vmatpush1.bf16.msra.mxu0 0
  %933 = vmatprep.subr.bf16.mxu0 0
  %934 = vmatpush1.bf16.msra.mxu0 0
  %935 = vmatprep.subr.bf16.mxu0 0
  %936 = vmatpush1.bf16.msra.mxu0 0
  %937 = vmatprep.subr.bf16.mxu0 0
  %938 = vmatpush1.bf16.msra.mxu0 0
  %939 = vmatprep.subr.bf16.mxu0 0
  %940 = vmatpush1.bf16.msra.mxu0 0
  %941 = vmatprep.mubr.bf16.mxu0 0
  %942 = vmatmul.mubr.bf16.gmra.mrb[0].mxu0 %v842
  %v943 = vpop.f32.mrb[0].mxu0
  %v944 = vadd.f32 0.0, %v943
  %v945 = vpop.f32.mrb[0].mxu0
  %v946 = vpop.f32.mrb[0].mxu0
  %v947 = vpop.f32.mrb[0].mxu0
  %948 = vdwg.mxu0
  %v949 = vadd.f32 %v110, %v944
  %v950 = vxor.u32 %v949, 2147483648
  %v951 = vmul.f32 %v950, 1.442695
  %v952 = vpow.pop %v951
  %v953 = vadd.f32 %v952, 1.0
  %v954 = vrcp.pop %v953
  %v955 = vmul.f32 1.0, %v954
  %v956 = vtanh.pop %v949
  %v958 = vrot.slane %v782, 6
  %v960 = vmul.f32 %v955, %v958
  %962 = vrot.lane.b32.xlu0 %v956, 64
  %v963 = vpop.permute.xlu0 %962
  %v965 = vmul.f32 %v955, %v963
  %967 = vrot.lane.b32.xlu0 %v965, 32
  %v968 = vpop.permute.xlu0 %967
  %v970 = vadd.f32 %v960, %v968
  %v971 = vtanh.pop %v970
  %973 = vrot.lane.b32.xlu0 %v971, 64
  %v974 = vpop.permute.xlu0 %973
  %v976 = vmul.f32 %v955, %v974
  %v977 = vpack.c.bf16 %v976, %v976
  %v978 = vpack.c.bf16 %v908, %v908
  %980 = vrot.lane.b32.xlu0 %v978, 32
  %v981 = vpop.permute.xlu0 %980
  %v983 = vsel %vm125, %v981, 0
  %985 = vmatprep.subr.bf16.mxu0 0
  %986 = vmatpush1.bf16.msra.mxu0 %v203
  %987 = vmatprep.subr.bf16.mxu0 0
  %988 = vmatpush1.bf16.msra.mxu0 %v204
  %989 = vmatprep.subr.bf16.mxu0 0
  %990 = vmatpush1.bf16.msra.mxu0 0
  %991 = vmatprep.subr.bf16.mxu0 0
  %992 = vmatpush1.bf16.msra.mxu0 0
  %993 = vmatprep.subr.bf16.mxu0 0
  %994 = vmatpush1.bf16.msra.mxu0 0
  %995 = vmatprep.subr.bf16.mxu0 0
  %996 = vmatpush1.bf16.msra.mxu0 0
  %997 = vmatprep.subr.bf16.mxu0 0
  %998 = vmatpush1.bf16.msra.mxu0 0
  %999 = vmatprep.subr.bf16.mxu0 0
  %1000 = vmatpush1.bf16.msra.mxu0 0
  %1001 = vmatprep.subr.bf16.mxu0 0
  %1002 = vmatpush1.bf16.msra.mxu0 0
  %1003 = vmatprep.subr.bf16.mxu0 0
  %1004 = vmatpush1.bf16.msra.mxu0 0
  %1005 = vmatprep.subr.bf16.mxu0 0
  %1006 = vmatpush1.bf16.msra.mxu0 0
  %1007 = vmatprep.subr.bf16.mxu0 0
  %1008 = vmatpush1.bf16.msra.mxu0 0
  %1009 = vmatprep.subr.bf16.mxu0 0
  %1010 = vmatpush1.bf16.msra.mxu0 0
  %1011 = vmatprep.subr.bf16.mxu0 0
  %1012 = vmatpush1.bf16.msra.mxu0 0
  %1013 = vmatprep.subr.bf16.mxu0 0
  %1014 = vmatpush1.bf16.msra.mxu0 0
  %1015 = vmatprep.subr.bf16.mxu0 0
  %1016 = vmatpush1.bf16.msra.mxu0 0
  %1017 = vmatprep.mubr.bf16.mxu0 0
  %1018 = vmatmul.mubr.bf16.gmra.mrb[0].mxu0 %v983
  %v1019 = vpop.f32.mrb[0].mxu0
  %v1020 = vadd.f32 0.0, %v1019
  %v1021 = vpop.f32.mrb[0].mxu0
  %v1022 = vpop.f32.mrb[0].mxu0
  %v1023 = vpop.f32.mrb[0].mxu0
  %1024 = vdwg.mxu0
  %1026 = vrot.lane.b32.xlu0 %v977, 32
  %v1027 = vpop.permute.xlu0 %1026
  %v1029 = vsel %vm125, %v1027, 0
  %1031 = vmatprep.subr.bf16.mxu0 0
  %1032 = vmatpush1.bf16.msra.mxu0 %v258
  %1033 = vmatprep.subr.bf16.mxu0 0
  %1034 = vmatpush1.bf16.msra.mxu0 %v259
  %1035 = vmatprep.subr.bf16.mxu0 0
  %1036 = vmatpush1.bf16.msra.mxu0 0
  %1037 = vmatprep.subr.bf16.mxu0 0
  %1038 = vmatpush1.bf16.msra.mxu0 0
  %1039 = vmatprep.subr.bf16.mxu0 0
  %1040 = vmatpush1.bf16.msra.mxu0 0
  %1041 = vmatprep.subr.bf16.mxu0 0
  %1042 = vmatpush1.bf16.msra.mxu0 0
  %1043 = vmatprep.subr.bf16.mxu0 0
  %1044 = vmatpush1.bf16.msra.mxu0 0
  %1045 = vmatprep.subr.bf16.mxu0 0
  %1046 = vmatpush1.bf16.msra.mxu0 0
  %1047 = vmatprep.subr.bf16.mxu0 0
  %1048 = vmatpush1.bf16.msra.mxu0 0
  %1049 = vmatprep.subr.bf16.mxu0 0
  %1050 = vmatpush1.bf16.msra.mxu0 0
  %1051 = vmatprep.subr.bf16.mxu0 0
  %1052 = vmatpush1.bf16.msra.mxu0 0
  %1053 = vmatprep.subr.bf16.mxu0 0
  %1054 = vmatpush1.bf16.msra.mxu0 0
  %1055 = vmatprep.subr.bf16.mxu0 0
  %1056 = vmatpush1.bf16.msra.mxu0 0
  %1057 = vmatprep.subr.bf16.mxu0 0
  %1058 = vmatpush1.bf16.msra.mxu0 0
  %1059 = vmatprep.subr.bf16.mxu0 0
  %1060 = vmatpush1.bf16.msra.mxu0 0
  %1061 = vmatprep.subr.bf16.mxu0 0
  %1062 = vmatpush1.bf16.msra.mxu0 0
  %1063 = vmatprep.mubr.bf16.mxu0 0
  %1064 = vmatmul.mubr.bf16.gmra.mrb[0].mxu0 %v1029
  %v1065 = vpop.f32.mrb[0].mxu0
  %v1066 = vadd.f32 %v1020, %v1065
  %v1067 = vpop.f32.mrb[0].mxu0
  %v1068 = vpop.f32.mrb[0].mxu0
  %v1069 = vpop.f32.mrb[0].mxu0
  %1070 = vdwg.mxu0
  %v1071 = vadd.f32 %v1066, %v309
  %v1072 = vxor.u32 %v1071, 2147483648
  %v1073 = vmul.f32 %v1072, 1.442695
  %v1074 = vpow.pop %v1073
  %v1075 = vadd.f32 %v1074, 1.0
  %v1076 = vrcp.pop %v1075
  %v1077 = vmul.f32 1.0, %v1076
  %v1078 = vtanh.pop %v1071
  %v1079 = vmul.f32 %v1077, %v902
  %1081 = vrot.lane.b32.xlu0 %v1078, 64
  %v1082 = vpop.permute.xlu0 %1081
  %v1084 = vmul.f32 %v1077, %v1082
  %1086 = vrot.lane.b32.xlu0 %v1084, 32
  %v1087 = vpop.permute.xlu0 %1086
  %v1089 = vadd.f32 %v1079, %v1087
  %v1090 = vtanh.pop %v1089
  %1092 = vrot.lane.b32.xlu0 %v1090, 64
  %v1093 = vpop.permute.xlu0 %1092
  %v1095 = vmul.f32 %v1077, %v1093
  %1096 = vmatprep.subr.bf16.mxu0 0
  %1097 = vmatpush1.bf16.msra.mxu0 %v121
  %1098 = vmatprep.subr.bf16.mxu0 0
  %1099 = vmatpush1.bf16.msra.mxu0 %v122
  %1100 = vmatprep.subr.bf16.mxu0 0
  %1101 = vmatpush1.bf16.msra.mxu0 0
  %1102 = vmatprep.subr.bf16.mxu0 0
  %1103 = vmatpush1.bf16.msra.mxu0 0
  %1104 = vmatprep.subr.bf16.mxu0 0
  %1105 = vmatpush1.bf16.msra.mxu0 0
  %1106 = vmatprep.subr.bf16.mxu0 0
  %1107 = vmatpush1.bf16.msra.mxu0 0
  %1108 = vmatprep.subr.bf16.mxu0 0
  %1109 = vmatpush1.bf16.msra.mxu0 0
  %1110 = vmatprep.subr.bf16.mxu0 0
  %1111 = vmatpush1.bf16.msra.mxu0 0
  %1112 = vmatprep.subr.bf16.mxu0 0
  %1113 = vmatpush1.bf16.msra.mxu0 0
  %1114 = vmatprep.subr.bf16.mxu0 0
  %1115 = vmatpush1.bf16.msra.mxu0 0
  %1116 = vmatprep.subr.bf16.mxu0 0
  %1117 = vmatpush1.bf16.msra.mxu0 0
  %1118 = vmatprep.subr.bf16.mxu0 0
  %1119 = vmatpush1.bf16.msra.mxu0 0
  %1120 = vmatprep.subr.bf16.mxu0 0
  %1121 = vmatpush1.bf16.msra.mxu0 0
  %1122 = vmatprep.subr.bf16.mxu0 0
  %1123 = vmatpush1.bf16.msra.mxu0 0
  %1124 = vmatprep.subr.bf16.mxu0 0
  %1125 = vmatpush1.bf16.msra.mxu0 0
  %1126 = vmatprep.subr.bf16.mxu0 0
  %1127 = vmatpush1.bf16.msra.mxu0 0
  %1128 = vmatprep.mubr.bf16.mxu0 0
  %1129 = vmatmul.mubr.bf16.gmra.mrb[0].mxu0 %v1029
  %v1130 = vpop.f32.mrb[0].mxu0
  %v1131 = vadd.f32 0.0, %v1130
  %v1132 = vpop.f32.mrb[0].mxu0
  %v1133 = vpop.f32.mrb[0].mxu0
  %v1134 = vpop.f32.mrb[0].mxu0
  %1135 = vdwg.mxu0
  %v1137 = vrot.slane %v1131, 6
  %v1139 = vadd.f32 %v110, %v1137
  %v1140 = vxor.u32 %v1139, 2147483648
  %v1141 = vmul.f32 %v1140, 1.442695
  %v1142 = vpow.pop %v1141
  %v1143 = vadd.f32 %v1142, 1.0
  %v1144 = vrcp.pop %v1143
  %v1145 = vmul.f32 1.0, %v1144
  %v1146 = vtanh.pop %v1139
  %v1148 = vrot.slane %v970, 6
  %v1150 = vmul.f32 %v1145, %v1148
  %1152 = vrot.lane.b32.xlu0 %v1146, 64
  %v1153 = vpop.permute.xlu0 %1152
  %v1155 = vmul.f32 %v1145, %v1153
  %1157 = vrot.lane.b32.xlu0 %v1155, 32
  %v1158 = vpop.permute.xlu0 %1157
  %v1160 = vadd.f32 %v1150, %v1158
  %v1161 = vtanh.pop %v1160
  %1163 = vrot.lane.b32.xlu0 %v1161, 64
  %v1164 = vpop.permute.xlu0 %1163
  %v1166 = vmul.f32 %v1145, %v1164
  %v1167 = vpack.c.bf16 %v1166, %v1166
  %v1168 = vpack.c.bf16 %v1095, %v1095
  %1170 = vrot.lane.b32.xlu0 %v1168, 32
  %v1171 = vpop.permute.xlu0 %1170
  %v1173 = vsel %vm125, %v1171, 0
  %1175 = vmatprep.subr.bf16.mxu0 0
  %1176 = vmatpush1.bf16.msra.mxu0 %v203
  %1177 = vmatprep.subr.bf16.mxu0 0
  %1178 = vmatpush1.bf16.msra.mxu0 %v204
  %1179 = vmatprep.subr.bf16.mxu0 0
  %1180 = vmatpush1.bf16.msra.mxu0 0
  %1181 = vmatprep.subr.bf16.mxu0 0
  %1182 = vmatpush1.bf16.msra.mxu0 0
  %1183 = vmatprep.subr.bf16.mxu0 0
  %1184 = vmatpush1.bf16.msra.mxu0 0
  %1185 = vmatprep.subr.bf16.mxu0 0
  %1186 = vmatpush1.bf16.msra.mxu0 0
  %1187 = vmatprep.subr.bf16.mxu0 0
  %1188 = vmatpush1.bf16.msra.mxu0 0
  %1189 = vmatprep.subr.bf16.mxu0 0
  %1190 = vmatpush1.bf16.msra.mxu0 0
  %1191 = vmatprep.subr.bf16.mxu0 0
  %1192 = vmatpush1.bf16.msra.mxu0 0
  %1193 = vmatprep.subr.bf16.mxu0 0
  %1194 = vmatpush1.bf16.msra.mxu0 0
  %1195 = vmatprep.subr.bf16.mxu0 0
  %1196 = vmatpush1.bf16.msra.mxu0 0
  %1197 = vmatprep.subr.bf16.mxu0 0
  %1198 = vmatpush1.bf16.msra.mxu0 0
  %1199 = vmatprep.subr.bf16.mxu0 0
  %1200 = vmatpush1.bf16.msra.mxu0 0
  %1201 = vmatprep.subr.bf16.mxu0 0
  %1202 = vmatpush1.bf16.msra.mxu0 0
  %1203 = vmatprep.subr.bf16.mxu0 0
  %1204 = vmatpush1.bf16.msra.mxu0 0
  %1205 = vmatprep.subr.bf16.mxu0 0
  %1206 = vmatpush1.bf16.msra.mxu0 0
  %1207 = vmatprep.mubr.bf16.mxu0 0
  %1208 = vmatmul.mubr.bf16.gmra.mrb[0].mxu0 %v1173
  %v1209 = vpop.f32.mrb[0].mxu0
  %v1210 = vadd.f32 0.0, %v1209
  %v1211 = vpop.f32.mrb[0].mxu0
  %v1212 = vpop.f32.mrb[0].mxu0
  %v1213 = vpop.f32.mrb[0].mxu0
  %1214 = vdwg.mxu0
  %v1216 = vrot.slane %v1167, 1
  %1217 = vrot.lane.b32.xlu0 %v1216, 32
  %v1218 = vpop.permute.xlu0 %1217
  %v1220 = vsel %vm125, %v1218, 0
  %1222 = vmatprep.subr.bf16.mxu0 0
  %1223 = vmatpush1.bf16.msra.mxu0 %v258
  %1224 = vmatprep.subr.bf16.mxu0 0
  %1225 = vmatpush1.bf16.msra.mxu0 %v259
  %1226 = vmatprep.subr.bf16.mxu0 0
  %1227 = vmatpush1.bf16.msra.mxu0 0
  %1228 = vmatprep.subr.bf16.mxu0 0
  %1229 = vmatpush1.bf16.msra.mxu0 0
  %1230 = vmatprep.subr.bf16.mxu0 0
  %1231 = vmatpush1.bf16.msra.mxu0 0
  %1232 = vmatprep.subr.bf16.mxu0 0
  %1233 = vmatpush1.bf16.msra.mxu0 0
  %1234 = vmatprep.subr.bf16.mxu0 0
  %1235 = vmatpush1.bf16.msra.mxu0 0
  %1236 = vmatprep.subr.bf16.mxu0 0
  %1237 = vmatpush1.bf16.msra.mxu0 0
  %1238 = vmatprep.subr.bf16.mxu0 0
  %1239 = vmatpush1.bf16.msra.mxu0 0
  %1240 = vmatprep.subr.bf16.mxu0 0
  %1241 = vmatpush1.bf16.msra.mxu0 0
  %1242 = vmatprep.subr.bf16.mxu0 0
  %1243 = vmatpush1.bf16.msra.mxu0 0
  %1244 = vmatprep.subr.bf16.mxu0 0
  %1245 = vmatpush1.bf16.msra.mxu0 0
  %1246 = vmatprep.subr.bf16.mxu0 0
  %1247 = vmatpush1.bf16.msra.mxu0 0
  %1248 = vmatprep.subr.bf16.mxu0 0
  %1249 = vmatpush1.bf16.msra.mxu0 0
  %1250 = vmatprep.subr.bf16.mxu0 0
  %1251 = vmatpush1.bf16.msra.mxu0 0
  %1252 = vmatprep.subr.bf16.mxu0 0
  %1253 = vmatpush1.bf16.msra.mxu0 0
  %1254 = vmatprep.mubr.bf16.mxu0 0
  %1255 = vmatmul.mubr.bf16.gmra.mrb[0].mxu0 %v1220
  %v1256 = vpop.f32.mrb[0].mxu0
  %v1257 = vadd.f32 %v1210, %v1256
  %v1258 = vpop.f32.mrb[0].mxu0
  %v1259 = vpop.f32.mrb[0].mxu0
  %v1260 = vpop.f32.mrb[0].mxu0
  %1261 = vdwg.mxu0
  %v1262 = vadd.f32 %v1257, %v309
  %v1263 = vxor.u32 %v1262, 2147483648
  %v1264 = vmul.f32 %v1263, 1.442695
  %v1265 = vpow.pop %v1264
  %v1266 = vadd.f32 %v1265, 1.0
  %v1267 = vrcp.pop %v1266
  %v1268 = vmul.f32 1.0, %v1267
  %v1269 = vtanh.pop %v1262
  %v1270 = vmul.f32 %v1268, %v1089
  %1272 = vrot.lane.b32.xlu0 %v1269, 64
  %v1273 = vpop.permute.xlu0 %1272
  %v1275 = vmul.f32 %v1268, %v1273
  %1277 = vrot.lane.b32.xlu0 %v1275, 32
  %v1278 = vpop.permute.xlu0 %1277
  %v1280 = vadd.f32 %v1270, %v1278
  %v1281 = vtanh.pop %v1280
  %1283 = vrot.lane.b32.xlu0 %v1281, 64
  %v1284 = vpop.permute.xlu0 %1283
  %v1286 = vmul.f32 %v1268, %v1284
  %1287 = vmatprep.subr.bf16.mxu0 0
  %1288 = vmatpush1.bf16.msra.mxu0 %v121
  %1289 = vmatprep.subr.bf16.mxu0 0
  %1290 = vmatpush1.bf16.msra.mxu0 %v122
  %1291 = vmatprep.subr.bf16.mxu0 0
  %1292 = vmatpush1.bf16.msra.mxu0 0
  %1293 = vmatprep.subr.bf16.mxu0 0
  %1294 = vmatpush1.bf16.msra.mxu0 0
  %1295 = vmatprep.subr.bf16.mxu0 0
  %1296 = vmatpush1.bf16.msra.mxu0 0
  %1297 = vmatprep.subr.bf16.mxu0 0
  %1298 = vmatpush1.bf16.msra.mxu0 0
  %1299 = vmatprep.subr.bf16.mxu0 0
  %1300 = vmatpush1.bf16.msra.mxu0 0
  %1301 = vmatprep.subr.bf16.mxu0 0
  %1302 = vmatpush1.bf16.msra.mxu0 0
  %1303 = vmatprep.subr.bf16.mxu0 0
  %1304 = vmatpush1.bf16.msra.mxu0 0
  %1305 = vmatprep.subr.bf16.mxu0 0
  %1306 = vmatpush1.bf16.msra.mxu0 0
  %1307 = vmatprep.subr.bf16.mxu0 0
  %1308 = vmatpush1.bf16.msra.mxu0 0
  %1309 = vmatprep.subr.bf16.mxu0 0
  %1310 = vmatpush1.bf16.msra.mxu0 0
  %1311 = vmatprep.subr.bf16.mxu0 0
  %1312 = vmatpush1.bf16.msra.mxu0 0
  %1313 = vmatprep.subr.bf16.mxu0 0
  %1314 = vmatpush1.bf16.msra.mxu0 0
  %1315 = vmatprep.subr.bf16.mxu0 0
  %1316 = vmatpush1.bf16.msra.mxu0 0
  %1317 = vmatprep.subr.bf16.mxu0 0
  %1318 = vmatpush1.bf16.msra.mxu0 0
  %1319 = vmatprep.mubr.bf16.mxu0 0
  %1320 = vmatmul.mubr.bf16.gmra.mrb[0].mxu0 %v1220
  %v1321 = vpop.f32.mrb[0].mxu0
  %v1322 = vadd.f32 0.0, %v1321
  %v1323 = vpop.f32.mrb[0].mxu0
  %v1324 = vpop.f32.mrb[0].mxu0
  %v1325 = vpop.f32.mrb[0].mxu0
  %1326 = vdwg.mxu0
  %v1328 = vrot.slane %v1322, 4
  %v1330 = vadd.f32 %v110, %v1328
  %v1331 = vxor.u32 %v1330, 2147483648
  %v1332 = vmul.f32 %v1331, 1.442695
  %v1333 = vpow.pop %v1332
  %v1334 = vadd.f32 %v1333, 1.0
  %v1335 = vrcp.pop %v1334
  %v1336 = vmul.f32 1.0, %v1335
  %v1337 = vtanh.pop %v1330
  %v1339 = vrot.slane %v1160, 6
  %v1341 = vmul.f32 %v1336, %v1339
  %1343 = vrot.lane.b32.xlu0 %v1337, 64
  %v1344 = vpop.permute.xlu0 %1343
  %v1346 = vmul.f32 %v1336, %v1344
  %1348 = vrot.lane.b32.xlu0 %v1346, 32
  %v1349 = vpop.permute.xlu0 %1348
  %v1351 = vadd.f32 %v1341, %v1349
  %v1352 = vtanh.pop %v1351
  %1354 = vrot.lane.b32.xlu0 %v1352, 64
  %v1355 = vpop.permute.xlu0 %1354
  %v1357 = vmul.f32 %v1336, %v1355
  %v1358 = vpack.c.bf16 %v1357, %v1357
  %v1359 = vpack.c.bf16 %v1286, %v1286
  %1361 = vrot.lane.b32.xlu0 %v1359, 32
  %v1362 = vpop.permute.xlu0 %1361
  %v1364 = vsel %vm125, %v1362, 0
  %1366 = vmatprep.subr.bf16.mxu0 0
  %1367 = vmatpush1.bf16.msra.mxu0 %v203
  %1368 = vmatprep.subr.bf16.mxu0 0
  %1369 = vmatpush1.bf16.msra.mxu0 %v204
  %1370 = vmatprep.subr.bf16.mxu0 0
  %1371 = vmatpush1.bf16.msra.mxu0 0
  %1372 = vmatprep.subr.bf16.mxu0 0
  %1373 = vmatpush1.bf16.msra.mxu0 0
  %1374 = vmatprep.subr.bf16.mxu0 0
  %1375 = vmatpush1.bf16.msra.mxu0 0
  %1376 = vmatprep.subr.bf16.mxu0 0
  %1377 = vmatpush1.bf16.msra.mxu0 0
  %1378 = vmatprep.subr.bf16.mxu0 0
  %1379 = vmatpush1.bf16.msra.mxu0 0
  %1380 = vmatprep.subr.bf16.mxu0 0
  %1381 = vmatpush1.bf16.msra.mxu0 0
  %1382 = vmatprep.subr.bf16.mxu0 0
  %1383 = vmatpush1.bf16.msra.mxu0 0
  %1384 = vmatprep.subr.bf16.mxu0 0
  %1385 = vmatpush1.bf16.msra.mxu0 0
  %1386 = vmatprep.subr.bf16.mxu0 0
  %1387 = vmatpush1.bf16.msra.mxu0 0
  %1388 = vmatprep.subr.bf16.mxu0 0
  %1389 = vmatpush1.bf16.msra.mxu0 0
  %1390 = vmatprep.subr.bf16.mxu0 0
  %1391 = vmatpush1.bf16.msra.mxu0 0
  %1392 = vmatprep.subr.bf16.mxu0 0
  %1393 = vmatpush1.bf16.msra.mxu0 0
  %1394 = vmatprep.subr.bf16.mxu0 0
  %1395 = vmatpush1.bf16.msra.mxu0 0
  %1396 = vmatprep.subr.bf16.mxu0 0
  %1397 = vmatpush1.bf16.msra.mxu0 0
  %1398 = vmatprep.mubr.bf16.mxu0 0
  %1399 = vmatmul.mubr.bf16.gmra.mrb[0].mxu0 %v1364
  %v1400 = vpop.f32.mrb[0].mxu0
  %v1401 = vadd.f32 0.0, %v1400
  %v1402 = vpop.f32.mrb[0].mxu0
  %v1403 = vpop.f32.mrb[0].mxu0
  %v1404 = vpop.f32.mrb[0].mxu0
  %1405 = vdwg.mxu0
  %v1407 = vrot.slane %v1358, 2
  %1408 = vrot.lane.b32.xlu0 %v1407, 32
  %v1409 = vpop.permute.xlu0 %1408
  %v1411 = vsel %vm125, %v1409, 0
  %1413 = vmatprep.subr.bf16.mxu0 0
  %1414 = vmatpush1.bf16.msra.mxu0 %v258
  %1415 = vmatprep.subr.bf16.mxu0 0
  %1416 = vmatpush1.bf16.msra.mxu0 %v259
  %1417 = vmatprep.subr.bf16.mxu0 0
  %1418 = vmatpush1.bf16.msra.mxu0 0
  %1419 = vmatprep.subr.bf16.mxu0 0
  %1420 = vmatpush1.bf16.msra.mxu0 0
  %1421 = vmatprep.subr.bf16.mxu0 0
  %1422 = vmatpush1.bf16.msra.mxu0 0
  %1423 = vmatprep.subr.bf16.mxu0 0
  %1424 = vmatpush1.bf16.msra.mxu0 0
  %1425 = vmatprep.subr.bf16.mxu0 0
  %1426 = vmatpush1.bf16.msra.mxu0 0
  %1427 = vmatprep.subr.bf16.mxu0 0
  %1428 = vmatpush1.bf16.msra.mxu0 0
  %1429 = vmatprep.subr.bf16.mxu0 0
  %1430 = vmatpush1.bf16.msra.mxu0 0
  %1431 = vmatprep.subr.bf16.mxu0 0
  %1432 = vmatpush1.bf16.msra.mxu0 0
  %1433 = vmatprep.subr.bf16.mxu0 0
  %1434 = vmatpush1.bf16.msra.mxu0 0
  %1435 = vmatprep.subr.bf16.mxu0 0
  %1436 = vmatpush1.bf16.msra.mxu0 0
  %1437 = vmatprep.subr.bf16.mxu0 0
  %1438 = vmatpush1.bf16.msra.mxu0 0
  %1439 = vmatprep.subr.bf16.mxu0 0
  %1440 = vmatpush1.bf16.msra.mxu0 0
  %1441 = vmatprep.subr.bf16.mxu0 0
  %1442 = vmatpush1.bf16.msra.mxu0 0
  %1443 = vmatprep.subr.bf16.mxu0 0
  %1444 = vmatpush1.bf16.msra.mxu0 0
  %1445 = vmatprep.mubr.bf16.mxu0 0
  %1446 = vmatmul.mubr.bf16.gmra.mrb[0].mxu0 %v1411
  %v1447 = vpop.f32.mrb[0].mxu0
  %v1448 = vadd.f32 %v1401, %v1447
  %v1449 = vpop.f32.mrb[0].mxu0
  %v1450 = vpop.f32.mrb[0].mxu0
  %v1451 = vpop.f32.mrb[0].mxu0
  %1452 = vdwg.mxu0
  %v1453 = vadd.f32 %v1448, %v309
  %v1454 = vxor.u32 %v1453, 2147483648
  %v1455 = vmul.f32 %v1454, 1.442695
  %v1456 = vpow.pop %v1455
  %v1457 = vadd.f32 %v1456, 1.0
  %v1458 = vrcp.pop %v1457
  %v1459 = vmul.f32 1.0, %v1458
  %v1460 = vtanh.pop %v1453
  %v1461 = vmul.f32 %v1459, %v1280
  %1463 = vrot.lane.b32.xlu0 %v1460, 64
  %v1464 = vpop.permute.xlu0 %1463
  %v1466 = vmul.f32 %v1459, %v1464
  %1468 = vrot.lane.b32.xlu0 %v1466, 32
  %v1469 = vpop.permute.xlu0 %1468
  %v1471 = vadd.f32 %v1461, %v1469
  %v1472 = vtanh.pop %v1471
  %1474 = vrot.lane.b32.xlu0 %v1472, 64
  %v1475 = vpop.permute.xlu0 %1474
  %v1477 = vmul.f32 %v1459, %v1475
  %1478 = vmatprep.subr.bf16.mxu0 0
  %1479 = vmatpush1.bf16.msra.mxu0 %v121
  %1480 = vmatprep.subr.bf16.mxu0 0
  %1481 = vmatpush1.bf16.msra.mxu0 %v122
  %1482 = vmatprep.subr.bf16.mxu0 0
  %1483 = vmatpush1.bf16.msra.mxu0 0
  %1484 = vmatprep.subr.bf16.mxu0 0
  %1485 = vmatpush1.bf16.msra.mxu0 0
  %1486 = vmatprep.subr.bf16.mxu0 0
  %1487 = vmatpush1.bf16.msra.mxu0 0
  %1488 = vmatprep.subr.bf16.mxu0 0
  %1489 = vmatpush1.bf16.msra.mxu0 0
  %1490 = vmatprep.subr.bf16.mxu0 0
  %1491 = vmatpush1.bf16.msra.mxu0 0
  %1492 = vmatprep.subr.bf16.mxu0 0
  %1493 = vmatpush1.bf16.msra.mxu0 0
  %1494 = vmatprep.subr.bf16.mxu0 0
  %1495 = vmatpush1.bf16.msra.mxu0 0
  %1496 = vmatprep.subr.bf16.mxu0 0
  %1497 = vmatpush1.bf16.msra.mxu0 0
  %1498 = vmatprep.subr.bf16.mxu0 0
  %1499 = vmatpush1.bf16.msra.mxu0 0
  %1500 = vmatprep.subr.bf16.mxu0 0
  %1501 = vmatpush1.bf16.msra.mxu0 0
  %1502 = vmatprep.subr.bf16.mxu0 0
  %1503 = vmatpush1.bf16.msra.mxu0 0
  %1504 = vmatprep.subr.bf16.mxu0 0
  %1505 = vmatpush1.bf16.msra.mxu0 0
  %1506 = vmatprep.subr.bf16.mxu0 0
  %1507 = vmatpush1.bf16.msra.mxu0 0
  %1508 = vmatprep.subr.bf16.mxu0 0
  %1509 = vmatpush1.bf16.msra.mxu0 0
  %1510 = vmatprep.mubr.bf16.mxu0 0
  %1511 = vmatmul.mubr.bf16.gmra.mrb[0].mxu0 %v1411
  %v1512 = vpop.f32.mrb[0].mxu0
  %v1513 = vadd.f32 0.0, %v1512
  %v1514 = vpop.f32.mrb[0].mxu0
  %v1515 = vpop.f32.mrb[0].mxu0
  %v1516 = vpop.f32.mrb[0].mxu0
  %1517 = vdwg.mxu0
  %v1519 = vrot.slane %v1513, 2
  %v1521 = vadd.f32 %v110, %v1519
  %v1522 = vxor.u32 %v1521, 2147483648
  %v1523 = vmul.f32 %v1522, 1.442695
  %v1524 = vpow.pop %v1523
  %v1525 = vadd.f32 %v1524, 1.0
  %v1526 = vrcp.pop %v1525
  %v1527 = vmul.f32 1.0, %v1526
  %v1528 = vtanh.pop %v1521
  %v1530 = vrot.slane %v1351, 6
  %v1532 = vmul.f32 %v1527, %v1530
  %1534 = vrot.lane.b32.xlu0 %v1528, 64
  %v1535 = vpop.permute.xlu0 %1534
  %v1537 = vmul.f32 %v1527, %v1535
  %1539 = vrot.lane.b32.xlu0 %v1537, 32
  %v1540 = vpop.permute.xlu0 %1539
  %v1542 = vadd.f32 %v1532, %v1540
  %v1543 = vtanh.pop %v1542
  %1545 = vrot.lane.b32.xlu0 %v1543, 64
  %v1546 = vpop.permute.xlu0 %1545
  %v1548 = vmul.f32 %v1527, %v1546
  %v1549 = vpack.c.bf16 %v1548, %v1548
  %v1550 = vpack.c.bf16 %v1477, %v1477
  %1552 = vrot.lane.b32.xlu0 %v1550, 32
  %v1553 = vpop.permute.xlu0 %1552
  %v1555 = vsel %vm125, %v1553, 0
  %1557 = vmatprep.subr.bf16.mxu0 0
  %1558 = vmatpush1.bf16.msra.mxu0 %v203
  %1559 = vmatprep.subr.bf16.mxu0 0
  %1560 = vmatpush1.bf16.msra.mxu0 %v204
  %1561 = vmatprep.subr.bf16.mxu0 0
  %1562 = vmatpush1.bf16.msra.mxu0 0
  %1563 = vmatprep.subr.bf16.mxu0 0
  %1564 = vmatpush1.bf16.msra.mxu0 0
  %1565 = vmatprep.subr.bf16.mxu0 0
  %1566 = vmatpush1.bf16.msra.mxu0 0
  %1567 = vmatprep.subr.bf16.mxu0 0
  %1568 = vmatpush1.bf16.msra.mxu0 0
  %1569 = vmatprep.subr.bf16.mxu0 0
  %1570 = vmatpush1.bf16.msra.mxu0 0
  %1571 = vmatprep.subr.bf16.mxu0 0
  %1572 = vmatpush1.bf16.msra.mxu0 0
  %1573 = vmatprep.subr.bf16.mxu0 0
  %1574 = vmatpush1.bf16.msra.mxu0 0
  %1575 = vmatprep.subr.bf16.mxu0 0
  %1576 = vmatpush1.bf16.msra.mxu0 0
  %1577 = vmatprep.subr.bf16.mxu0 0
  %1578 = vmatpush1.bf16.msra.mxu0 0
  %1579 = vmatprep.subr.bf16.mxu0 0
  %1580 = vmatpush1.bf16.msra.mxu0 0
  %1581 = vmatprep.subr.bf16.mxu0 0
  %1582 = vmatpush1.bf16.msra.mxu0 0
  %1583 = vmatprep.subr.bf16.mxu0 0
  %1584 = vmatpush1.bf16.msra.mxu0 0
  %1585 = vmatprep.subr.bf16.mxu0 0
  %1586 = vmatpush1.bf16.msra.mxu0 0
  %1587 = vmatprep.subr.bf16.mxu0 0
  %1588 = vmatpush1.bf16.msra.mxu0 0
  %1589 = vmatprep.mubr.bf16.mxu0 0
  %1590 = vmatmul.mubr.bf16.gmra.mrb[0].mxu0 %v1555
  %v1591 = vpop.f32.mrb[0].mxu0
  %v1592 = vadd.f32 0.0, %v1591
  %v1593 = vpop.f32.mrb[0].mxu0
  %v1594 = vpop.f32.mrb[0].mxu0
  %v1595 = vpop.f32.mrb[0].mxu0
  %1596 = vdwg.mxu0
  %v1598 = vrot.slane %v1549, 3
  %1599 = vrot.lane.b32.xlu0 %v1598, 32
  %v1600 = vpop.permute.xlu0 %1599
  %v1602 = vsel %vm125, %v1600, 0
  %1604 = vmatprep.subr.bf16.mxu0 0
  %1605 = vmatpush1.bf16.msra.mxu0 %v258
  %1606 = vmatprep.subr.bf16.mxu0 0
  %1607 = vmatpush1.bf16.msra.mxu0 %v259
  %1608 = vmatprep.subr.bf16.mxu0 0
  %1609 = vmatpush1.bf16.msra.mxu0 0
  %1610 = vmatprep.subr.bf16.mxu0 0
  %1611 = vmatpush1.bf16.msra.mxu0 0
  %1612 = vmatprep.subr.bf16.mxu0 0
  %1613 = vmatpush1.bf16.msra.mxu0 0
  %1614 = vmatprep.subr.bf16.mxu0 0
  %1615 = vmatpush1.bf16.msra.mxu0 0
  %1616 = vmatprep.subr.bf16.mxu0 0
  %1617 = vmatpush1.bf16.msra.mxu0 0
  %1618 = vmatprep.subr.bf16.mxu0 0
  %1619 = vmatpush1.bf16.msra.mxu0 0
  %1620 = vmatprep.subr.bf16.mxu0 0
  %1621 = vmatpush1.bf16.msra.mxu0 0
  %1622 = vmatprep.subr.bf16.mxu0 0
  %1623 = vmatpush1.bf16.msra.mxu0 0
  %1624 = vmatprep.subr.bf16.mxu0 0
  %1625 = vmatpush1.bf16.msra.mxu0 0
  %1626 = vmatprep.subr.bf16.mxu0 0
  %1627 = vmatpush1.bf16.msra.mxu0 0
  %1628 = vmatprep.subr.bf16.mxu0 0
  %1629 = vmatpush1.bf16.msra.mxu0 0
  %1630 = vmatprep.subr.bf16.mxu0 0
  %1631 = vmatpush1.bf16.msra.mxu0 0
  %1632 = vmatprep.subr.bf16.mxu0 0
  %1633 = vmatpush1.bf16.msra.mxu0 0
  %1634 = vmatprep.subr.bf16.mxu0 0
  %1635 = vmatpush1.bf16.msra.mxu0 0
  %1636 = vmatprep.mubr.bf16.mxu0 0
  %1637 = vmatmul.mubr.bf16.gmra.mrb[0].mxu0 %v1602
  %v1638 = vpop.f32.mrb[0].mxu0
  %v1639 = vadd.f32 %v1592, %v1638
  %v1640 = vpop.f32.mrb[0].mxu0
  %v1641 = vpop.f32.mrb[0].mxu0
  %v1642 = vpop.f32.mrb[0].mxu0
  %1643 = vdwg.mxu0
  %v1644 = vadd.f32 %v1639, %v309
  %v1645 = vxor.u32 %v1644, 2147483648
  %v1646 = vmul.f32 %v1645, 1.442695
  %v1647 = vpow.pop %v1646
  %v1648 = vadd.f32 %v1647, 1.0
  %v1649 = vrcp.pop %v1648
  %v1650 = vmul.f32 1.0, %v1649
  %v1651 = vtanh.pop %v1644
  %v1652 = vmul.f32 %v1650, %v1471
  %1654 = vrot.lane.b32.xlu0 %v1651, 64
  %v1655 = vpop.permute.xlu0 %1654
  %v1657 = vmul.f32 %v1650, %v1655
  %1659 = vrot.lane.b32.xlu0 %v1657, 32
  %v1660 = vpop.permute.xlu0 %1659
  %v1662 = vadd.f32 %v1652, %v1660
  %v1663 = vtanh.pop %v1662
  %1665 = vrot.lane.b32.xlu0 %v1663, 64
  %v1666 = vpop.permute.xlu0 %1665
  %v1668 = vmul.f32 %v1650, %v1666
  %v1670 = vrot.slane %v526, 6
  %v1673 = vrot.slane %v717, 4
  %v1676 = vrot.slane %v908, 2
  %v1679 = vrot.slane %v1286, 6
  %v1682 = vrot.slane %v1477, 4
  %v1685 = vrot.slane %v1668, 2
  %vm1687 = vcmask 1041408
  %v1688 = vsel %vm1687, %v335, %v1670
  %vm1689 = vcmask 1043456
  %v1690 = vsel %vm1689, %v1688, %v1673
  %vm1691 = vcmask 1045504
  %v1692 = vsel %vm1691, %v1690, %v1676
  %v1693 = vsel %vm1687, %v1095, %v1679
  %v1694 = vsel %vm1689, %v1693, %v1682
  %v1695 = vsel %vm1691, %v1694, %v1685
  %v1696 = vpack.c.bf16 %v1695, %v1692
  %v1697 = vld [vmem:[%s7] sm:$0xf]
  %v1698 = vld [vmem:[%s7 + $0x4] sm:$0xf]
  %v1699 = vld [vmem:[%s7 + $0x8] sm:$0xf]
  %v1700 = vld [vmem:[%s7 + $0xc] sm:$0xf]
  %v1701 = vld [vmem:[%s8] sm:$0x1]
  %v1703 = vlaneseq
  %v1704 = vshrl.u32 %v1703, 7
  %v1705 = vsub.s32 0, %v1704
  %v1706 = vrot.slane %v1701, %v1705
  %1709 = vrot.lane.b32.xlu0 %v1696, 32
  %v1710 = vpop.permute.xlu0 %1709
  %v1715 = vunpack.c.l.b16 %v1697
  %v1716 = vunpack.c.l.b16 %v1698
  %v1717 = vunpack.c.l.b16 %v1699
  %v1718 = vunpack.c.l.b16 %v1700
  %v1719 = vpack.c.b16 %v1716, %v1715
  %v1720 = vpack.c.b16 %v1718, %v1717
  %v1724 = vsel %vm125, %v1710, 0
  %1726 = vmatprep.subr.bf16.mxu0 0
  %1727 = vmatpush1.bf16.msra.mxu0 %v1719
  %1728 = vmatprep.subr.bf16.mxu0 0
  %1729 = vmatpush1.bf16.msra.mxu0 %v1720
  %1730 = vmatprep.subr.bf16.mxu0 0
  %1731 = vmatpush1.bf16.msra.mxu0 0
  %1732 = vmatprep.subr.bf16.mxu0 0
  %1733 = vmatpush1.bf16.msra.mxu0 0
  %1734 = vmatprep.subr.bf16.mxu0 0
  %1735 = vmatpush1.bf16.msra.mxu0 0
  %1736 = vmatprep.subr.bf16.mxu0 0
  %1737 = vmatpush1.bf16.msra.mxu0 0
  %1738 = vmatprep.subr.bf16.mxu0 0
  %1739 = vmatpush1.bf16.msra.mxu0 0
  %1740 = vmatprep.subr.bf16.mxu0 0
  %1741 = vmatpush1.bf16.msra.mxu0 0
  %1742 = vmatprep.subr.bf16.mxu0 0
  %1743 = vmatpush1.bf16.msra.mxu0 0
  %1744 = vmatprep.subr.bf16.mxu0 0
  %1745 = vmatpush1.bf16.msra.mxu0 0
  %1746 = vmatprep.subr.bf16.mxu0 0
  %1747 = vmatpush1.bf16.msra.mxu0 0
  %1748 = vmatprep.subr.bf16.mxu0 0
  %1749 = vmatpush1.bf16.msra.mxu0 0
  %1750 = vmatprep.subr.bf16.mxu0 0
  %1751 = vmatpush1.bf16.msra.mxu0 0
  %1752 = vmatprep.subr.bf16.mxu0 0
  %1753 = vmatpush1.bf16.msra.mxu0 0
  %1754 = vmatprep.subr.bf16.mxu0 0
  %1755 = vmatpush1.bf16.msra.mxu0 0
  %1756 = vmatprep.subr.bf16.mxu0 0
  %1757 = vmatpush1.bf16.msra.mxu0 0
  %1758 = vmatprep.mubr.bf16.mxu0 0
  %1759 = vmatmul.mubr.bf16.gmra.mrb[0].mxu0 %v1724
  %v1760 = vpop.f32.mrb[0].mxu0
  %v1761 = vadd.f32 %v1706, %v1760
  %v1762 = vpop.f32.mrb[0].mxu0
  %v1763 = vpop.f32.mrb[0].mxu0
  %v1764 = vadd.f32 %v1706, %v1763
  %v1765 = vpop.f32.mrb[0].mxu0
  %1766 = vdwg.mxu0
  %1767 = vst [vmem:[%s9] sm:$0xff] %v1761
  %1768 = vst [vmem:[%s9 + $0x8] sm:$0xff] %v1764
  // Predicated region
  $region38: #{lstmwrapper2_forward.1} parent=0 // pred_check
    _
  $region39: #{lstmwrapper2_forward.1} parent=0 // pred_check_branch
    %1770 = sbr.rel (0) target = $region41
  $region40: #{lstmwrapper2_forward.1} parent=0 // pred_region
    _
  $region41: #{lstmwrapper2_forward.1} parent=0 // pred_fallthru
    _
  // Predicated region
  $region42: #{lstmwrapper2_forward.1} parent=0 // pred_check
    _
  $region43: #{lstmwrapper2_forward.1} parent=0 // pred_check_branch
    %1772 = sbr.rel (0) target = $region45
  $region44: #{lstmwrapper2_forward.1} parent=0 // pred_region
    _
  $region45: #{lstmwrapper2_forward.1} parent=0 // pred_fallthru
    _

</llo_original>
